<compile_context>
chip_gen: v5e
topology: v5e:2x2
jax: 0.10.0
libtpu: 0.0.40
codegen_flags: <defaults>
</compile_context>

<pallas_src>
import jax
import jax.numpy as jnp
import numpy as np
from jax.experimental import pallas as pl
from jax.experimental.pallas import tpu as pltpu


def _round_up(x: int, m: int) -> int:
    return ((x + m - 1) // m) * m


def _pad2d(x, rows, cols, dtype):
    """Zero-pad a 2-D array to (rows, cols) and cast to dtype."""
    x = x.astype(dtype)
    pr, pc = rows - x.shape[0], cols - x.shape[1]
    if pr or pc:
        x = jnp.pad(x, ((0, pr), (0, pc)))
    return x


def encoder_kernel(ids_ref, w_ref, self_ref, feat_hbm, w_self_ref, w_neigh_ref,
                   out_ref, staging, sem):
    """One batch-tile grid step.

    ids_ref    : (b_pad * s_pad,) i32 SMEM  flat sampled-neighbor ids (scalar prefetch)
    w_ref      : (tb, s_pad)      f32       per-sample mean weights (1/deg, 0 = pad)
    self_ref   : (tb, Fp)         bf16      gathered self features
    feat_hbm   : (N, Fp)          f32 HBM   full feature table (manual DMA gather)
    w_self_ref : (Fp, Ep)         bf16      W[:, :F].T  (pre-transposed, padded)
    w_neigh_ref: (Fp, Ep)         bf16      W[:, F:].T
    out_ref    : (tb, Ep)         f32       output tile
    staging    : (tb * s_pad, Fp) f32 VMEM  gathered neighbor rows
    sem        : DMA semaphore
    """
    i = pl.program_id(0)
    tile_b, s_pad = w_ref.shape
    f_pad = staging.shape[-1]
    rows = tile_b * s_pad
    base = i * rows

    # 1) Issue one row DMA per (batch-row, sample) slot of this tile.
    @pl.loop(0, rows)
    def _issue(j):
        rid = ids_ref[base + j]
        pltpu.make_async_copy(feat_hbm.at[pl.ds(rid, 1), :],
                              staging.at[pl.ds(j, 1), :],
                              sem).start()

    # 2) Self projection runs while the gather DMAs are in flight.
    z = jnp.dot(self_ref[...], w_self_ref[...],
                preferred_element_type=jnp.float32)

    # 3) Wait for all gathered rows (one wait per row-sized copy).
    @pl.loop(0, rows)
    def _wait(j):
        pltpu.make_async_copy(feat_hbm.at[pl.ds(0, 1), :],
                              staging.at[pl.ds(j, 1), :],
                              sem).wait()

    # 4) Mean aggregation: exact f32 weighted sum over the S sampled rows.
    g = staging[...].reshape(tile_b, s_pad, f_pad)
    neigh = jnp.sum(g * w_ref[...][:, :, None], axis=1)          # (tb, Fp) f32

    # 5) Neighbor projection + ReLU.
    z = z + jnp.dot(neigh.astype(w_neigh_ref.dtype), w_neigh_ref[...],
                    preferred_element_type=jnp.float32)
    out_ref[...] = jnp.maximum(z, 0.0).astype(out_ref.dtype)


def _pick_epad(embed_dim: int) -> int:
    """128-lane aligned output dim; bump to 256 when the extra padding is <=25%
    (fills the 256-wide MXU on v6e/v7x, harmless elsewhere)."""
    e128 = _round_up(embed_dim, 128)
    e256 = _round_up(embed_dim, 256)
    return e256 if e256 * 4 <= e128 * 5 else e128


def _pick_tiles(batch, s_pad, f_pad, e_pad):
    """Choose (tile_b, vmem_limit_bytes) from the device VMEM capacity."""
    try:
        vmem_cap = int(getattr(pltpu.get_tpu_info(), "vmem_capacity_bytes",
                               64 * 1024 * 1024))
    except Exception:  # conservative fallback (v7x-sized VMEM)
        vmem_cap = 64 * 1024 * 1024
    vmem_limit = min(int(vmem_cap * 3 // 4), 96 * 1024 * 1024)

    b16 = _round_up(max(batch, 1), 16)        # bf16 sublane-packed tile height
    tile_b = min(b16, 256)
    # Keep >= 2 batch tiles when the batch allows so the "parallel" grid axis
    # actually has work to shard across v7x's two TensorCores.
    if b16 >= 32:
        tile_b = min(tile_b, _round_up((b16 + 1) // 2, 16))

    def vmem_needed(tb):
        staging = tb * s_pad * f_pad * 4          # gather staging buffer
        temps = 2 * staging                       # weighted-sum temporaries
        self_blk = 2 * tb * f_pad * 2             # self feats (double-buffered)
        w_blk = 2 * tb * s_pad * 4                # mean weights
        weights = 2 * 2 * f_pad * e_pad * 2       # weight halves (upper bound: 2 bufs)
        out_blk = 2 * tb * e_pad * 4              # output block
        return staging + temps + self_blk + w_blk + weights + out_blk

    while tile_b > 16 and vmem_needed(tile_b) > vmem_limit:
        tile_b -= 16
    return tile_b, vmem_limit


def encoder_forward(features, nodes, neigh_ids, neigh_w, weight, *,
                    compute_dtype=jnp.bfloat16):
    """GraphSAGE Encoder forward (first_layer=True, gcn=False).

    features : (N, F)  f32  node-feature table (stays in HBM, gathered in-kernel)
    nodes    : (B,)    i32  batch node ids
    neigh_ids: (B, S)  i32  sampled neighbor ids (MeanAggregator samples; pad = 0)
    neigh_w  : (B, S)  f32  per-sample mean weights (1/#sampled, 0 for pad slots)
    weight   : (E, 2F) f32  projection weight (xavier_uniform in the reference)
    returns  : (B, E)  f32 == relu(weight @ cat([features[nodes], mean_neigh], 1).T).T
    """
    num_nodes, feat_dim = features.shape
    batch, num_sample = neigh_ids.shape
    embed_dim = weight.shape[0]
    assert weight.shape[1] == 2 * feat_dim

    f_pad = _round_up(feat_dim, 128)
    e_pad = _pick_epad(embed_dim)
    s_pad = _round_up(num_sample, 8)
    tile_b, vmem_limit = _pick_tiles(batch, s_pad, f_pad, e_pad)
    b_pad = _round_up(batch, tile_b)
    grid0 = b_pad // tile_b

    # Host-side prep.  All padding is zeros => results are exact, sliced off below.
    self_feats = features[nodes]
    feat_p = _pad2d(features, num_nodes, f_pad, jnp.float32)        # HBM-resident
    self_p = _pad2d(self_feats, b_pad, f_pad, compute_dtype)
    w_self_t = _pad2d(weight[:, :feat_dim].T, f_pad, e_pad, compute_dtype)
    w_neigh_t = _pad2d(weight[:, feat_dim:].T, f_pad, e_pad, compute_dtype)
    ids_p = jnp.zeros((b_pad, s_pad), jnp.int32).at[:batch, :num_sample].set(
        neigh_ids.astype(jnp.int32))
    w_p = jnp.zeros((b_pad, s_pad), jnp.float32).at[:batch, :num_sample].set(
        neigh_w.astype(jnp.float32))
    ids_flat = ids_p.reshape(-1)
    # TODO(synk): ids_flat lives in SMEM via scalar prefetch; for very large
    # batches (batch*num_sample*4B beyond the ~1 MiB SMEM budget) chunk the batch
    # outside this call, and add cross-tile gather prefetch (double-buffered
    # staging) if a sequential-grid variant is acceptable.

    flops = 2 * b_pad * s_pad * f_pad + 2 * 2 * b_pad * f_pad * e_pad
    bytes_accessed = (ids_flat.size * 4 + w_p.size * 4 + self_p.size * 2
                      + b_pad * s_pad * f_pad * 4          # gathered rows
                      + (w_self_t.size + w_neigh_t.size) * 2
                      + b_pad * e_pad * 4)

    def _make_call(weight_pipeline_mode):
        wkw = ({} if weight_pipeline_mode is None
               else dict(pipeline_mode=weight_pipeline_mode))
        grid_spec = pltpu.PrefetchScalarGridSpec(
            num_scalar_prefetch=1,
            grid=(grid0,),
            in_specs=[
                pl.BlockSpec((tile_b, s_pad), lambda i, ids: (i, 0)),   # mean weights
                pl.BlockSpec((tile_b, f_pad), lambda i, ids: (i, 0)),   # self feats
                pl.BlockSpec(memory_space=pl.ANY),                      # feature table
                pl.BlockSpec((f_pad, e_pad), lambda i, ids: (0, 0), **wkw),  # W_self^T
                pl.BlockSpec((f_pad, e_pad), lambda i, ids: (0, 0), **wkw),  # W_neigh^T
            ],
            out_specs=pl.BlockSpec((tile_b, e_pad), lambda i, ids: (i, 0)),
            scratch_shapes=[pltpu.VMEM((tile_b * s_pad, f_pad), jnp.float32),
                            pltpu.SemaphoreType.DMA(())],
        )
        return pl.pallas_call(
            encoder_kernel,
            out_shape=jax.ShapeDtypeStruct((b_pad, e_pad), jnp.float32),
            grid_spec=grid_spec,
            compiler_params=pltpu.CompilerParams(
                dimension_semantics=("parallel",),
                vmem_limit_bytes=int(vmem_limit)),
            cost_estimate=pl.CostEstimate(
                flops=int(flops), transcendentals=0,
                bytes_accessed=int(bytes_accessed)),
        )

    args = (ids_flat, w_p, self_p, feat_p, w_self_t, w_neigh_t)
    try:
        # Single-buffer the constant weight blocks (saves VMEM, esp. on v7x).
        out = jax.block_until_ready(_make_call(pl.Buffered(1))(*args))
    except Exception:
        # Fall back to default double buffering if Buffered(1) is rejected.
        out = _make_call(None)(*args)

    return out[:batch, :embed_dim]


def build_sampled_neighbors(num_nodes, batch_nodes, num_sample):
    """Deterministic synthetic adjacency lists + MeanAggregator-style sampling.

    Returns (neigh_ids (B,S) i32, neigh_w (B,S) f32, dense_mask (B,N) f32) where
    dense_mask is the row-normalized mask the reference MeanAggregator builds.
    """
    rng = np.random.default_rng(0)
    B = len(batch_nodes)
    ids = np.zeros((B, num_sample), dtype=np.int32)
    w = np.zeros((B, num_sample), dtype=np.float32)
    dense = np.zeros((B, num_nodes), dtype=np.float32)
    for i, n in enumerate(batch_nodes):
        deg = 3 + (int(n) % 5)
        neighs = rng.choice(num_nodes, size=deg, replace=False)
        if deg > num_sample:
            neighs = rng.choice(neighs, size=num_sample, replace=False)
        neighs = np.unique(neighs)
        cnt = max(len(neighs), 1)
        ids[i, :len(neighs)] = neighs
        w[i, :len(neighs)] = 1.0 / cnt
        dense[i, neighs] = 1.0 / cnt
    return jnp.asarray(ids), jnp.asarray(w), jnp.asarray(dense)


if __name__ == "__main__":
    num_nodes, feat_dim, embed_dim, batch, num_sample = 64, 16, 32, 8, 10

    key = jax.random.PRNGKey(0)
    k_feat, k_w = jax.random.split(key)

    features = jax.random.normal(k_feat, (num_nodes, feat_dim), dtype=jnp.float32)

    # xavier_uniform_ on weight (embed_dim, 2*feat_dim): U(-a, a), a = sqrt(6/(fan_in+fan_out))
    output_dim = 2 * feat_dim  # gcn=False
    bound = float(np.sqrt(6.0 / (embed_dim + output_dim)))
    weight = jax.random.uniform(
        k_w, (embed_dim, output_dim), dtype=jnp.float32, minval=-bound, maxval=bound)

    nodes = jnp.arange(batch, dtype=jnp.int32)
    neigh_ids, neigh_w, adj_dense = build_sampled_neighbors(
        num_nodes, np.arange(batch), num_sample)

    out = encoder_forward(features, nodes, neigh_ids, neigh_w, weight)
    out = jax.block_until_ready(out)

    # Reference (plain JAX, f32) of the PyTorch semantics.  The aggregation is
    # exact f32 in the kernel; the projections use bf16 MXU operands with f32
    # accumulation, hence the GraphSAGE-typical tolerance.
    self_feats = features[nodes]
    neigh_feats = adj_dense @ features
    combined = jnp.concatenate([self_feats, neigh_feats], axis=1)
    ref = jnp.maximum(weight @ combined.T, 0.0).T
    np.testing.assert_allclose(np.asarray(out), np.asarray(ref), rtol=5e-2, atol=5e-2)

    print("KERNEL_OK")
</pallas_src>

<mosaic_0001>
module attributes {stable_mosaic.version = 11 : i64} {
  func.func @encoder_kernel(%arg0: i32, %arg1: memref<256xi32, #tpu.memory_space<smem>>, %arg2: memref<16x16xf32, #tpu.memory_space<vmem>>, %arg3: memref<16x128xbf16, #tpu.memory_space<vmem>>, %arg4: memref<64x128xf32, #tpu.memory_space<any>>, %arg5: memref<128x128xbf16, #tpu.memory_space<vmem>>, %arg6: memref<128x128xbf16, #tpu.memory_space<vmem>>, %arg7: memref<16x128xf32, #tpu.memory_space<vmem>>, %arg8: memref<256x128xf32, #tpu.memory_space<vmem>>, %arg9: memref<!tpu.dma_semaphore, #tpu.memory_space<semaphore_mem>>) attributes {dimension_semantics = [#tpu.dimension_semantics<parallel>], iteration_bounds = array<i64: 1>, scalar_prefetch = 1 : i64, scratch_operands = 2 : i64, tpu.core_type = #tpu.core_type<tc>, window_params = [{transform_indices = @transform_0, window_bounds = array<i64: 16, 16>}, {transform_indices = @transform_1, window_bounds = array<i64: 16, 128>}, {}, {pipeline_mode = #tpu.pipeline_mode<synchronous>, transform_indices = @transform_3, window_bounds = array<i64: 128, 128>}, {pipeline_mode = #tpu.pipeline_mode<synchronous>, transform_indices = @transform_4, window_bounds = array<i64: 128, 128>}, {transform_indices = @transform_5, window_bounds = array<i64: 16, 128>}]} {
    %c256_i32 = arith.constant 256 : i32
    %0 = arith.muli %arg0, %c256_i32 : i32
    %c0_i32 = arith.constant 0 : i32
    %c256_i32_0 = arith.constant 256 : i32
    %1 = arith.addi %c0_i32, %c256_i32_0 : i32
    %c1_i32 = arith.constant 1 : i32
    scf.for %arg10 = %c0_i32 to %1 step %c1_i32  : i32 {
      %c1_i32_20 = arith.constant 1 : i32
      %20 = arith.muli %arg10, %c1_i32_20 : i32
      %c0_i32_21 = arith.constant 0 : i32
      %21 = arith.addi %c0_i32_21, %20 : i32
      %22 = arith.addi %0, %21 : i32
      %23 = arith.index_cast %22 : i32 to index
      %24 = memref.load %arg1[%23] : memref<256xi32, #tpu.memory_space<smem>>
      %c0_i32_22 = arith.constant 0 : i32
      %25 = tpu.memref_slice %arg4[%24, %c0_i32_22] : memref<64x128xf32, #tpu.memory_space<any>> -> memref<1x128xf32, #tpu.memory_space<any>>
      %c0_i32_23 = arith.constant 0 : i32
      %26 = tpu.memref_slice %arg8[%21, %c0_i32_23] : memref<256x128xf32, #tpu.memory_space<vmem>> -> memref<1x128xf32, #tpu.memory_space<vmem>>
      tpu.enqueue_dma source(%25 : memref<1x128xf32, #tpu.memory_space<any>>) target(%26 : memref<1x128xf32, #tpu.memory_space<vmem>>) target_semaphore(%arg9 : memref<!tpu.dma_semaphore, #tpu.memory_space<semaphore_mem>>)
    }
    %c256_i32_1 = arith.constant 256 : i32
    %c0 = arith.constant 0 : index
    %c0_2 = arith.constant 0 : index
    %2 = vector.load %arg3[%c0, %c0_2] : memref<16x128xbf16, #tpu.memory_space<vmem>>, vector<16x128xbf16>
    %c0_3 = arith.constant 0 : index
    %c0_4 = arith.constant 0 : index
    %3 = vector.load %arg5[%c0_3, %c0_4] : memref<128x128xbf16, #tpu.memory_space<vmem>>, vector<128x128xbf16>
    %cst = arith.constant dense<0.000000e+00> : vector<16x128xf32>
    %4 = tpu.matmul %2, %3, %cst {dimension_numbers = #tpu.dot_dimension_numbers<[1], [0], [0], [1], [0, 0, 1, 1], [], []>} : vector<16x128xbf16>, vector<128x128xbf16>, vector<16x128xf32> -> vector<16x128xf32>
    %c0_i32_5 = arith.constant 0 : i32
    %c256_i32_6 = arith.constant 256 : i32
    %5 = arith.addi %c0_i32_5, %c256_i32_6 : i32
    %c1_i32_7 = arith.constant 1 : i32
    scf.for %arg10 = %c0_i32_5 to %5 step %c1_i32_7  : i32 {
      %c1_i32_20 = arith.constant 1 : i32
      %20 = arith.muli %arg10, %c1_i32_20 : i32
      %c0_i32_21 = arith.constant 0 : i32
      %21 = arith.addi %c0_i32_21, %20 : i32
      %c0_i32_22 = arith.constant 0 : i32
      %c0_i32_23 = arith.constant 0 : i32
      %22 = tpu.memref_slice %arg4[%c0_i32_22, %c0_i32_23] : memref<64x128xf32, #tpu.memory_space<any>> -> memref<1x128xf32, #tpu.memory_space<any>>
      %c0_i32_24 = arith.constant 0 : i32
      %23 = tpu.memref_slice %arg8[%21, %c0_i32_24] : memref<256x128xf32, #tpu.memory_space<vmem>> -> memref<1x128xf32, #tpu.memory_space<vmem>>
      tpu.wait_dma2 semaphore(%arg9 : memref<!tpu.dma_semaphore, #tpu.memory_space<semaphore_mem>>) src(%22 : memref<1x128xf32, #tpu.memory_space<any>>) dst(%23 : memref<1x128xf32, #tpu.memory_space<vmem>>)
    }
    %c256_i32_8 = arith.constant 256 : i32
    %c0_9 = arith.constant 0 : index
    %c0_10 = arith.constant 0 : index
    %6 = vector.load %arg8[%c0_9, %c0_10] : memref<256x128xf32, #tpu.memory_space<vmem>>, vector<256x128xf32>
    %7 = vector.shape_cast %6 : vector<256x128xf32> to vector<16x16x128xf32>
    %c0_11 = arith.constant 0 : index
    %c0_12 = arith.constant 0 : index
    %8 = vector.load %arg2[%c0_11, %c0_12] : memref<16x16xf32, #tpu.memory_space<vmem>>, vector<16x16xf32>
    %9 = vector.shape_cast %8 : vector<16x16xf32> to vector<16x16x1xf32>
    %10 = vector.broadcast %9 : vector<16x16x1xf32> to vector<16x16x128xf32>
    %11 = arith.mulf %7, %10 : vector<16x16x128xf32>
    %cst_13 = arith.constant dense<0.000000e+00> : vector<16x128xf32>
    %12 = vector.multi_reduction <add>, %11, %cst_13 [1] : vector<16x16x128xf32> to vector<16x128xf32>
    %13 = arith.truncf %12 : vector<16x128xf32> to vector<16x128xbf16>
    %c0_14 = arith.constant 0 : index
    %c0_15 = arith.constant 0 : index
    %14 = vector.load %arg6[%c0_14, %c0_15] : memref<128x128xbf16, #tpu.memory_space<vmem>>, vector<128x128xbf16>
    %cst_16 = arith.constant dense<0.000000e+00> : vector<16x128xf32>
    %15 = tpu.matmul %13, %14, %cst_16 {dimension_numbers = #tpu.dot_dimension_numbers<[1], [0], [0], [1], [0, 0, 1, 1], [], []>} : vector<16x128xbf16>, vector<128x128xbf16>, vector<16x128xf32> -> vector<16x128xf32>
    %16 = arith.addf %4, %15 : vector<16x128xf32>
    %cst_17 = arith.constant 0.000000e+00 : f32
    %17 = vector.broadcast %cst_17 : f32 to vector<16x128xf32>
    %18 = arith.maximumf %16, %17 : vector<16x128xf32>
    %c0_18 = arith.constant 0 : index
    %c0_19 = arith.constant 0 : index
    %19 = vector.load %arg7[%c0_18, %c0_19] : memref<16x128xf32, #tpu.memory_space<vmem>>, vector<16x128xf32>
    tpu.vector_store %arg7[%c0_18, %c0_19], %18 {strides = array<i32>} : memref<16x128xf32, #tpu.memory_space<vmem>>, vector<16x128xf32>,
    return
  }
  func.func @transform_0(%arg0: i32, %arg1: memref<256xi32, #tpu.memory_space<smem>>) -> (i32, i32) {
    %c0_i32 = arith.constant 0 : i32
    %c0_i32_0 = arith.constant 0 : i32
    return %arg0, %c0_i32 : i32, i32
  }
  func.func @transform_1(%arg0: i32, %arg1: memref<256xi32, #tpu.memory_space<smem>>) -> (i32, i32) {
    %c0_i32 = arith.constant 0 : i32
    %c0_i32_0 = arith.constant 0 : i32
    return %arg0, %c0_i32 : i32, i32
  }
  func.func @transform_3(%arg0: i32, %arg1: memref<256xi32, #tpu.memory_space<smem>>) -> (i32, i32) {
    %c0_i32 = arith.constant 0 : i32
    %c0_i32_0 = arith.constant 0 : i32
    %c0_i32_1 = arith.constant 0 : i32
    return %c0_i32, %c0_i32_0 : i32, i32
  }
  func.func @transform_4(%arg0: i32, %arg1: memref<256xi32, #tpu.memory_space<smem>>) -> (i32, i32) {
    %c0_i32 = arith.constant 0 : i32
    %c0_i32_0 = arith.constant 0 : i32
    %c0_i32_1 = arith.constant 0 : i32
    return %c0_i32, %c0_i32_0 : i32, i32
  }
  func.func @transform_5(%arg0: i32, %arg1: memref<256xi32, #tpu.memory_space<smem>>) -> (i32, i32) {
    %c0_i32 = arith.constant 0 : i32
    %c0_i32_0 = arith.constant 0 : i32
    return %arg0, %c0_i32 : i32, i32
  }
}

module attributes {stable_mosaic.version = 11 : i64} {
  func.func @encoder_kernel(%arg0: i32, %arg1: memref<256xi32, #tpu.memory_space<smem>>, %arg2: memref<16x16xf32, #tpu.memory_space<vmem>>, %arg3: memref<16x128xbf16, #tpu.memory_space<vmem>>, %arg4: memref<64x128xf32, #tpu.memory_space<any>>, %arg5: memref<128x128xbf16, #tpu.memory_space<vmem>>, %arg6: memref<128x128xbf16, #tpu.memory_space<vmem>>, %arg7: memref<16x128xf32, #tpu.memory_space<vmem>>, %arg8: memref<256x128xf32, #tpu.memory_space<vmem>>, %arg9: memref<!tpu.dma_semaphore, #tpu.memory_space<semaphore_mem>>) attributes {dimension_semantics = [#tpu.dimension_semantics<parallel>], iteration_bounds = array<i64: 1>, scalar_prefetch = 1 : i64, scratch_operands = 2 : i64, tpu.core_type = #tpu.core_type<tc>, window_params = [{transform_indices = @transform_0, window_bounds = array<i64: 16, 16>}, {transform_indices = @transform_1, window_bounds = array<i64: 16, 128>}, {}, {pipeline_mode = #tpu.pipeline_mode<synchronous>, transform_indices = @transform_3, window_bounds = array<i64: 128, 128>}, {pipeline_mode = #tpu.pipeline_mode<synchronous>, transform_indices = @transform_4, window_bounds = array<i64: 128, 128>}, {transform_indices = @transform_5, window_bounds = array<i64: 16, 128>}]} {
    %c256_i32 = arith.constant 256 : i32
    %0 = arith.muli %arg0, %c256_i32 : i32
    %c0_i32 = arith.constant 0 : i32
    %c256_i32_0 = arith.constant 256 : i32
    %1 = arith.addi %c0_i32, %c256_i32_0 : i32
    %c1_i32 = arith.constant 1 : i32
    scf.for %arg10 = %c0_i32 to %1 step %c1_i32  : i32 {
      %c1_i32_20 = arith.constant 1 : i32
      %20 = arith.muli %arg10, %c1_i32_20 : i32
      %c0_i32_21 = arith.constant 0 : i32
      %21 = arith.addi %c0_i32_21, %20 : i32
      %22 = arith.addi %0, %21 : i32
      %23 = arith.index_cast %22 : i32 to index
      %24 = memref.load %arg1[%23] : memref<256xi32, #tpu.memory_space<smem>>
      %c0_i32_22 = arith.constant 0 : i32
      %25 = tpu.memref_slice %arg4[%24, %c0_i32_22] : memref<64x128xf32, #tpu.memory_space<any>> -> memref<1x128xf32, #tpu.memory_space<any>>
      %c0_i32_23 = arith.constant 0 : i32
      %26 = tpu.memref_slice %arg8[%21, %c0_i32_23] : memref<256x128xf32, #tpu.memory_space<vmem>> -> memref<1x128xf32, #tpu.memory_space<vmem>>
      tpu.enqueue_dma source(%25 : memref<1x128xf32, #tpu.memory_space<any>>) target(%26 : memref<1x128xf32, #tpu.memory_space<vmem>>) target_semaphore(%arg9 : memref<!tpu.dma_semaphore, #tpu.memory_space<semaphore_mem>>)
    }
    %c256_i32_1 = arith.constant 256 : i32
    %c0 = arith.constant 0 : index
    %c0_2 = arith.constant 0 : index
    %2 = vector.load %arg3[%c0, %c0_2] : memref<16x128xbf16, #tpu.memory_space<vmem>>, vector<16x128xbf16>
    %c0_3 = arith.constant 0 : index
    %c0_4 = arith.constant 0 : index
    %3 = vector.load %arg5[%c0_3, %c0_4] : memref<128x128xbf16, #tpu.memory_space<vmem>>, vector<128x128xbf16>
    %cst = arith.constant dense<0.000000e+00> : vector<16x128xf32>
    %4 = tpu.matmul %2, %3, %cst {dimension_numbers = #tpu.dot_dimension_numbers<[1], [0], [0], [1], [0, 0, 1, 1], [], []>} : vector<16x128xbf16>, vector<128x128xbf16>, vector<16x128xf32> -> vector<16x128xf32>
    %c0_i32_5 = arith.constant 0 : i32
    %c256_i32_6 = arith.constant 256 : i32
    %5 = arith.addi %c0_i32_5, %c256_i32_6 : i32
    %c1_i32_7 = arith.constant 1 : i32
    scf.for %arg10 = %c0_i32_5 to %5 step %c1_i32_7  : i32 {
      %c1_i32_20 = arith.constant 1 : i32
      %20 = arith.muli %arg10, %c1_i32_20 : i32
      %c0_i32_21 = arith.constant 0 : i32
      %21 = arith.addi %c0_i32_21, %20 : i32
      %c0_i32_22 = arith.constant 0 : i32
      %c0_i32_23 = arith.constant 0 : i32
      %22 = tpu.memref_slice %arg4[%c0_i32_22, %c0_i32_23] : memref<64x128xf32, #tpu.memory_space<any>> -> memref<1x128xf32, #tpu.memory_space<any>>
      %c0_i32_24 = arith.constant 0 : i32
      %23 = tpu.memref_slice %arg8[%21, %c0_i32_24] : memref<256x128xf32, #tpu.memory_space<vmem>> -> memref<1x128xf32, #tpu.memory_space<vmem>>
      tpu.wait_dma2 semaphore(%arg9 : memref<!tpu.dma_semaphore, #tpu.memory_space<semaphore_mem>>) src(%22 : memref<1x128xf32, #tpu.memory_space<any>>) dst(%23 : memref<1x128xf32, #tpu.memory_space<vmem>>)
    }
    %c256_i32_8 = arith.constant 256 : i32
    %c0_9 = arith.constant 0 : index
    %c0_10 = arith.constant 0 : index
    %6 = vector.load %arg8[%c0_9, %c0_10] : memref<256x128xf32, #tpu.memory_space<vmem>>, vector<256x128xf32>
    %7 = vector.shape_cast %6 : vector<256x128xf32> to vector<16x16x128xf32>
    %c0_11 = arith.constant 0 : index
    %c0_12 = arith.constant 0 : index
    %8 = vector.load %arg2[%c0_11, %c0_12] : memref<16x16xf32, #tpu.memory_space<vmem>>, vector<16x16xf32>
    %9 = vector.shape_cast %8 : vector<16x16xf32> to vector<16x16x1xf32>
    %10 = vector.broadcast %9 : vector<16x16x1xf32> to vector<16x16x128xf32>
    %11 = arith.mulf %7, %10 : vector<16x16x128xf32>
    %cst_13 = arith.constant dense<0.000000e+00> : vector<16x128xf32>
    %12 = vector.multi_reduction <add>, %11, %cst_13 [1] : vector<16x16x128xf32> to vector<16x128xf32>
    %13 = arith.truncf %12 : vector<16x128xf32> to vector<16x128xbf16>
    %c0_14 = arith.constant 0 : index
    %c0_15 = arith.constant 0 : index
    %14 = vector.load %arg6[%c0_14, %c0_15] : memref<128x128xbf16, #tpu.memory_space<vmem>>, vector<128x128xbf16>
    %cst_16 = arith.constant dense<0.000000e+00> : vector<16x128xf32>
    %15 = tpu.matmul %13, %14, %cst_16 {dimension_numbers = #tpu.dot_dimension_numbers<[1], [0], [0], [1], [0, 0, 1, 1], [], []>} : vector<16x128xbf16>, vector<128x128xbf16>, vector<16x128xf32> -> vector<16x128xf32>
    %16 = arith.addf %4, %15 : vector<16x128xf32>
    %cst_17 = arith.constant 0.000000e+00 : f32
    %17 = vector.broadcast %cst_17 : f32 to vector<16x128xf32>
    %18 = arith.maximumf %16, %17 : vector<16x128xf32>
    %c0_18 = arith.constant 0 : index
    %c0_19 = arith.constant 0 : index
    %19 = vector.load %arg7[%c0_18, %c0_19] : memref<16x128xf32, #tpu.memory_space<vmem>>, vector<16x128xf32>
    tpu.vector_store %arg7[%c0_18, %c0_19], %18 {strides = array<i32>} : memref<16x128xf32, #tpu.memory_space<vmem>>, vector<16x128xf32>,
    return
  }
  func.func @transform_0(%arg0: i32, %arg1: memref<256xi32, #tpu.memory_space<smem>>) -> (i32, i32) {
    %c0_i32 = arith.constant 0 : i32
    %c0_i32_0 = arith.constant 0 : i32
    return %arg0, %c0_i32 : i32, i32
  }
  func.func @transform_1(%arg0: i32, %arg1: memref<256xi32, #tpu.memory_space<smem>>) -> (i32, i32) {
    %c0_i32 = arith.constant 0 : i32
    %c0_i32_0 = arith.constant 0 : i32
    return %arg0, %c0_i32 : i32, i32
  }
  func.func @transform_3(%arg0: i32, %arg1: memref<256xi32, #tpu.memory_space<smem>>) -> (i32, i32) {
    %c0_i32 = arith.constant 0 : i32
    %c0_i32_0 = arith.constant 0 : i32
    %c0_i32_1 = arith.constant 0 : i32
    return %c0_i32, %c0_i32_0 : i32, i32
  }
  func.func @transform_4(%arg0: i32, %arg1: memref<256xi32, #tpu.memory_space<smem>>) -> (i32, i32) {
    %c0_i32 = arith.constant 0 : i32
    %c0_i32_0 = arith.constant 0 : i32
    %c0_i32_1 = arith.constant 0 : i32
    return %c0_i32, %c0_i32_0 : i32, i32
  }
  func.func @transform_5(%arg0: i32, %arg1: memref<256xi32, #tpu.memory_space<smem>>) -> (i32, i32) {
    %c0_i32 = arith.constant 0 : i32
    %c0_i32_0 = arith.constant 0 : i32
    return %arg0, %c0_i32 : i32, i32
  }
}

</mosaic_0001>

<llo_original>
// kernel: tpu_custom_call.1
$region0: #{tpu_custom_call.1}
  #allocation0 [shape = 'u32[]', space=smem, size = 0x4, offset = 0x4, fixed_abs, tag = 'smem constant byte address 0x4 - core index']
  #allocation1 [shape = 'u32[72,128]{1,0:T(1,128)}', space=vmem, size = 0x9000, scoped, tag = 'internal scratch']
  #allocation2 [shape = 'f32[256,128]{1,0:T(8,128)}', space=vmem, size = 0x20000, scoped, tag = 'scratch operand']
  #allocation3 [shape = 's32[1]{0}', space=sflag, size = 0x4, scoped, tag = 'scratch operand']
  #allocation4 [shape = 's32[1]{0}', space=sflag, size = 0x4, scoped, tag = 'scoped memory for tpu_custom_call.1']
  #allocation5 [shape = 'u8[1024]{0}', space=smem, size = 0x400, scoped, tag = 'prefetched SMEM operand 0']
  #allocation15 [shape = 's32[]', space=sflag, size = 0x4, offset = 0, fixed_abs, tag = 'sflag constant byte address 0x0 - dummy sync flag']
  #allocation16 [shape = 's32[]', space=sflag, size = 0x4, offset = 0, fixed_abs, tag = 'sflag constant byte address 0x0 - dummy sync flag']
  #allocation17 [shape = 'u32[]', space=smem, size = 0x4, offset = 0x44, fixed_abs, tag = 'smem constant byte address 0x44 - assertion arg 0']
  #allocation18 [shape = 'u32[]', space=smem, size = 0x4, offset = 0x48, fixed_abs, tag = 'smem constant byte address 0x48 - assertion arg 1']
  %s0 = inlined_call_operand.hbm [shape: s32[256], index: 0, kind: input, shape index: {}]
  %s1 = inlined_call_operand.hbm [shape: f32[16,16], index: 1, kind: input, shape index: {}]
  %s2 = inlined_call_operand.hbm [shape: bf16[16,128], index: 2, kind: input, shape index: {}]
  %s3 = inlined_call_operand.hbm [shape: f32[64,128], index: 3, kind: input, shape index: {}]
  %s4 = inlined_call_operand.hbm [shape: bf16[128,128], index: 4, kind: input, shape index: {}]
  %s5 = inlined_call_operand.hbm [shape: bf16[128,128], index: 5, kind: input, shape index: {}]
  %s6 = inlined_call_operand.hbm [shape: f32[16,128], index: 6, kind: output, shape index: {}]
  %s7 = sld [smem:[#allocation0]]
  $region60: #{tpu_custom_call.1} parent=0
    _
  %s9 = ssub.s32 1, %s7
  %s10 = scalar_select 0, %s9, %s7
  %s12 = sshll.u32 %s0, 4
  %s13 = int_to_ptr.hbm [resolvable:$true] %s12
  %15 = dma.hbm_to_smem %s13, 32, [#allocation5], [#allocation4]
  %17 = dma.done [#allocation4], 32
  %18 = sfence
  $region1: #{tpu_custom_call.1} parent=0
    #allocation6 [shape = 'u8[8192]{0}', space=vmem, size = 0x2000, scoped, tag = 'input window, operand 1, single buffered']
    #allocation7 [shape = 's32[1]{0}', space=sflag, size = 0x4, scoped, tag = 'scoped memory for tpu_custom_call.1']
    #allocation8 [shape = 's32[1]{0}', space=sflag, size = 0x4, scoped, tag = 'scoped memory for tpu_custom_call.1']
    #allocation9 [shape = 'u8[4096]{0}', space=vmem, size = 0x1000, scoped, tag = 'input window, operand 2, single buffered']
    #allocation10 [shape = 's32[1]{0}', space=sflag, size = 0x4, scoped, tag = 'scoped memory for tpu_custom_call.1']
    #allocation11 [shape = 'u8[32768]{0}', space=vmem, size = 0x8000, scoped, tag = 'input window, operand 4, single buffered']
    #allocation12 [shape = 'u8[32768]{0}', space=vmem, size = 0x8000, scoped, tag = 'input window, operand 5, single buffered']
    #allocation13 [shape = 's32[1]{0}', space=sflag, size = 0x4, scoped, tag = 'scoped memory for tpu_custom_call.1']
    #allocation14 [shape = 'u8[8192]{0}', space=vmem, size = 0x2000, scoped, tag = 'output window, operand 0, single buffered']
    %19 = vsyncpa [#allocation7], 0
    %20 = vsyncpa [#allocation10], 0
    %21 = vsyncpa [#allocation13], 0
    %22 = vsyncpa [#allocation8], 0
    // Predicated region
    $region2: #{tpu_custom_call.1} parent=1 // pred_check
      _
    $region3: #{tpu_custom_call.1} parent=1 // pred_check_branch
      %24 = sbr.rel (0) target = $region5
    $region4: #{tpu_custom_call.1} parent=1 // pred_region
      %26 = vsyncadd [#allocation7], 0
      %s27 = sshll.u32 %s1, 4
      %s28 = int_to_ptr.hbm [resolvable:$true] %s27
      %s29 = sshll.u32 [#allocation6], 4
      %s30 = int_to_ptr.vmem [resolvable:$true] %s29
      %35 = dma.hbm_to_vmem [thread:$0]  %s28, 256, %s30, [#allocation7], 128, 128, 8
    $region5: #{tpu_custom_call.1} parent=1 // pred_fallthru
      _
    // Predicated region
    $region6: #{tpu_custom_call.1} parent=1 // pred_check
      _
    $region7: #{tpu_custom_call.1} parent=1 // pred_check_branch
      %37 = sbr.rel (0) target = $region9
    $region8: #{tpu_custom_call.1} parent=1 // pred_region
      %39 = vsyncadd [#allocation10], 0
      %s40 = sshll.u32 %s2, 4
      %s41 = int_to_ptr.hbm [resolvable:$true] %s40
      %s42 = sshll.u32 [#allocation9], 4
      %s43 = int_to_ptr.vmem [resolvable:$true] %s42
      %48 = dma.hbm_to_vmem [thread:$0]  %s41, 128, %s43, [#allocation10], 64, 64, 4
    $region9: #{tpu_custom_call.1} parent=1 // pred_fallthru
      _
    // Predicated region
    $region10: #{tpu_custom_call.1} parent=1 // pred_check
      _
    $region11: #{tpu_custom_call.1} parent=1 // pred_check_branch
      %50 = sbr.rel (0) target = $region13
    $region12: #{tpu_custom_call.1} parent=1 // pred_region
      %52 = vsyncadd [#allocation10], 0
      %s53 = sshll.u32 %s4, 4
      %s54 = int_to_ptr.hbm [resolvable:$true] %s53
      %s55 = sshll.u32 [#allocation11], 4
      %s56 = int_to_ptr.vmem [resolvable:$true] %s55
      %61 = dma.hbm_to_vmem [thread:$0]  %s54, 1024, %s56, [#allocation10], 64, 64, 4
    $region13: #{tpu_custom_call.1} parent=1 // pred_fallthru
      _
    // Predicated region
    $region14: #{tpu_custom_call.1} parent=1 // pred_check
      _
    $region15: #{tpu_custom_call.1} parent=1 // pred_check_branch
      %63 = sbr.rel (0) target = $region17
    $region16: #{tpu_custom_call.1} parent=1 // pred_region
      %65 = vsyncadd [#allocation13], 0
      %s66 = sshll.u32 %s5, 4
      %s67 = int_to_ptr.hbm [resolvable:$true] %s66
      %s68 = sshll.u32 [#allocation12], 4
      %s69 = int_to_ptr.vmem [resolvable:$true] %s68
      %74 = dma.hbm_to_vmem [thread:$0]  %s67, 1024, %s69, [#allocation13], 64, 64, 4
    $region17: #{tpu_custom_call.1} parent=1 // pred_fallthru
      _
    // Predicated region
    $region18: #{tpu_custom_call.1} parent=1 // pred_check
      _
    $region19: #{tpu_custom_call.1} parent=1 // pred_check_branch
      %76 = sbr.rel (0) target = $region21
    $region20: #{tpu_custom_call.1} parent=1 // pred_region
      %78 = dma.done [#allocation7], 256
    $region21: #{tpu_custom_call.1} parent=1 // pred_fallthru
      _
    // Predicated region
    $region22: #{tpu_custom_call.1} parent=1 // pred_check
      _
    $region23: #{tpu_custom_call.1} parent=1 // pred_check_branch
      %80 = sbr.rel (0) target = $region25
    $region24: #{tpu_custom_call.1} parent=1 // pred_region
      %82 = dma.done [#allocation10], 128
    $region25: #{tpu_custom_call.1} parent=1 // pred_fallthru
      _
    // Predicated region
    $region26: #{tpu_custom_call.1} parent=1 // pred_check
      _
    $region27: #{tpu_custom_call.1} parent=1 // pred_check_branch
      %84 = sbr.rel (0) target = $region29
    $region28: #{tpu_custom_call.1} parent=1 // pred_region
      %86 = dma.done [#allocation10], 1024
    $region29: #{tpu_custom_call.1} parent=1 // pred_fallthru
      _
    // Predicated region
    $region30: #{tpu_custom_call.1} parent=1 // pred_check
      _
    $region31: #{tpu_custom_call.1} parent=1 // pred_check_branch
      %88 = sbr.rel (0) target = $region33
    $region32: #{tpu_custom_call.1} parent=1 // pred_region
      %90 = dma.done [#allocation13], 1024
    $region33: #{tpu_custom_call.1} parent=1 // pred_fallthru
      _
    %s91 = smul.u32 0, 256
    loop: start=0, step=1, limit=256
    $region34: #{tpu_custom_call.1} parent=1 // loop_pre_header
      _
    $region35: #{tpu_custom_call.1} parent=1 // loop_header
      %s93 = sphi 0, %s97
      %p94 = scmp.ge.s32.totalorder %s93, 256
    $region36: #{tpu_custom_call.1} parent=1 // loop_header_branch
      %96 = sbr.rel (%p94) target = $region40
    $region37: #{tpu_custom_call.1} parent=1 // loop_body
      %s98 = sadd.s32 %s91, %s93
      %s99 = sld [smem:[#allocation5 + %s98]]
      %s100 = scalar_lea.hbm %s3, %s99
      %s101 = scalar_lea.vmem [#allocation2], %s93
      // Predicated region
      $region41: #{tpu_custom_call.1} parent=37 // pred_check
        _
      $region42: #{tpu_custom_call.1} parent=37 // pred_check_branch
        %103 = sbr.rel target = $region44
      $region43: #{tpu_custom_call.1} parent=37 // pred_region
        %104 = sst [smem:[#allocation17]] [#allocation16]
        %105 = sst [smem:[#allocation18]] [#allocation15]
      $region44: #{tpu_custom_call.1} parent=37 // pred_fallthru
        _
      %107 = shalt.err (0)
      %s109 = sshll.u32 %s100, 4
      %s110 = int_to_ptr.hbm [resolvable:$true] %s109
      %s111 = sshll.u32 %s101, 4
      %s112 = int_to_ptr.vmem [resolvable:$true] %s111
      %114 = dma.hbm_to_vmem [thread:$0]  %s110, 16, %s112, [#allocation3]
    $region38: #{tpu_custom_call.1} parent=1 // loop_footer
      %s97 = sadd.s32 1, %s93
    $region39: #{tpu_custom_call.1} parent=1 // loop_footer_branch
      %92 = sbr.rel target = $region35
    $region40: #{tpu_custom_call.1} parent=1 // loop_exit
      _
    %v115 = vld [vmem:[#allocation9] sm:$0xf]
    %v116 = vld [vmem:[#allocation9 + $0x4] sm:$0xf]
    %v117 = vld [vmem:[#allocation11] sm:$0xf]
    %v118 = vld [vmem:[#allocation11 + $0x4] sm:$0xf]
    %v119 = vld [vmem:[#allocation11 + $0x8] sm:$0xf]
    %v120 = vld [vmem:[#allocation11 + $0xc] sm:$0xf]
    %v121 = vld [vmem:[#allocation11 + $0x10] sm:$0xf]
    %v122 = vld [vmem:[#allocation11 + $0x14] sm:$0xf]
    %v123 = vld [vmem:[#allocation11 + $0x18] sm:$0xf]
    %v124 = vld [vmem:[#allocation11 + $0x1c] sm:$0xf]
    %v125 = vld [vmem:[#allocation11 + $0x20] sm:$0xf]
    %v126 = vld [vmem:[#allocation11 + $0x24] sm:$0xf]
    %v127 = vld [vmem:[#allocation11 + $0x28] sm:$0xf]
    %v128 = vld [vmem:[#allocation11 + $0x2c] sm:$0xf]
    %v129 = vld [vmem:[#allocation11 + $0x30] sm:$0xf]
    %v130 = vld [vmem:[#allocation11 + $0x34] sm:$0xf]
    %v131 = vld [vmem:[#allocation11 + $0x38] sm:$0xf]
    %v132 = vld [vmem:[#allocation11 + $0x3c] sm:$0xf]
    loop: start=0, step=1, limit=256
    $region45: #{tpu_custom_call.1} parent=1 // loop_pre_header
      _
    $region46: #{tpu_custom_call.1} parent=1 // loop_header
      %s134 = sphi 0, %s138
      %p135 = scmp.ge.s32.totalorder %s134, 256
    $region47: #{tpu_custom_call.1} parent=1 // loop_header_branch
      %137 = sbr.rel (%p135) target = $region51
    $region48: #{tpu_custom_call.1} parent=1 // loop_body
      %s139 = smul.u32 1, 1
      %s140 = sshll.u32 %s139, 4
      %141 = dma.done [#allocation3], %s140
    $region49: #{tpu_custom_call.1} parent=1 // loop_footer
      %s138 = sadd.s32 1, %s134
    $region50: #{tpu_custom_call.1} parent=1 // loop_footer_branch
      %133 = sbr.rel target = $region46
    $region51: #{tpu_custom_call.1} parent=1 // loop_exit
      _
    %v142 = vld [vmem:[#allocation2] sm:$0xff]
    %v143 = vld [vmem:[#allocation2 + $0x8] sm:$0xff]
    %v144 = vld [vmem:[#allocation2 + $0x10] sm:$0xff]
    %v145 = vld [vmem:[#allocation2 + $0x18] sm:$0xff]
    %v146 = vld [vmem:[#allocation2 + $0x20] sm:$0xff]
    %v147 = vld [vmem:[#allocation2 + $0x28] sm:$0xff]
    %v148 = vld [vmem:[#allocation2 + $0x30] sm:$0xff]
    %v149 = vld [vmem:[#allocation2 + $0x38] sm:$0xff]
    %v150 = vld [vmem:[#allocation2 + $0x40] sm:$0xff]
    %v151 = vld [vmem:[#allocation2 + $0x48] sm:$0xff]
    %v152 = vld [vmem:[#allocation2 + $0x50] sm:$0xff]
    %v153 = vld [vmem:[#allocation2 + $0x58] sm:$0xff]
    %v154 = vld [vmem:[#allocation2 + $0x60] sm:$0xff]
    %v155 = vld [vmem:[#allocation2 + $0x68] sm:$0xff]
    %v156 = vld [vmem:[#allocation2 + $0x70] sm:$0xff]
    %v157 = vld [vmem:[#allocation2 + $0x78] sm:$0xff]
    %v158 = vld [vmem:[#allocation2 + $0x80] sm:$0xff]
    %v159 = vld [vmem:[#allocation2 + $0x88] sm:$0xff]
    %v160 = vld [vmem:[#allocation2 + $0x90] sm:$0xff]
    %v161 = vld [vmem:[#allocation2 + $0x98] sm:$0xff]
    %v162 = vld [vmem:[#allocation2 + $0xa0] sm:$0xff]
    %v163 = vld [vmem:[#allocation2 + $0xa8] sm:$0xff]
    %v164 = vld [vmem:[#allocation2 + $0xb0] sm:$0xff]
    %v165 = vld [vmem:[#allocation2 + $0xb8] sm:$0xff]
    %v166 = vld [vmem:[#allocation2 + $0xc0] sm:$0xff]
    %v167 = vld [vmem:[#allocation2 + $0xc8] sm:$0xff]
    %v168 = vld [vmem:[#allocation2 + $0xd0] sm:$0xff]
    %v169 = vld [vmem:[#allocation2 + $0xd8] sm:$0xff]
    %v170 = vld [vmem:[#allocation2 + $0xe0] sm:$0xff]
    %v171 = vld [vmem:[#allocation2 + $0xe8] sm:$0xff]
    %v172 = vld [vmem:[#allocation2 + $0xf0] sm:$0xff]
    %v173 = vld [vmem:[#allocation2 + $0xf8] sm:$0xff]
    %v174 = vld [vmem:[#allocation6] sm:$0xff]
    %v175 = vld [vmem:[#allocation6 + $0x8] sm:$0xff]
    %v176 = vperm.slane %v174, 0
    %v177 = vlaneseq
    %v178 = vshrl.u32 %v177, 7
    %180 = vset.pattern.permute.xlu0 %v178
    %181 = vperm.xlu0 %180, %v176
    %v182 = vpop.permute.xlu0 %181
    %v183 = vlaneseq
    %v184 = vshrl.u32 %v183, 7
    %v185 = vadd.s32 %v184, 8
    %186 = vset.pattern.permute.xlu0 %v185
    %187 = vperm.xlu0 %186, %v176
    %v188 = vpop.permute.xlu0 %187
    %v189 = vperm.slane %v174, 1
    %v190 = vlaneseq
    %v191 = vshrl.u32 %v190, 7
    %193 = vset.pattern.permute.xlu0 %v191
    %194 = vperm.xlu0 %193, %v189
    %v195 = vpop.permute.xlu0 %194
    %v196 = vlaneseq
    %v197 = vshrl.u32 %v196, 7
    %v198 = vadd.s32 %v197, 8
    %199 = vset.pattern.permute.xlu0 %v198
    %200 = vperm.xlu0 %199, %v189
    %v201 = vpop.permute.xlu0 %200
    %v202 = vperm.slane %v174, 2
    %v203 = vlaneseq
    %v204 = vshrl.u32 %v203, 7
    %206 = vset.pattern.permute.xlu0 %v204
    %207 = vperm.xlu0 %206, %v202
    %v208 = vpop.permute.xlu0 %207
    %v209 = vlaneseq
    %v210 = vshrl.u32 %v209, 7
    %v211 = vadd.s32 %v210, 8
    %212 = vset.pattern.permute.xlu0 %v211
    %213 = vperm.xlu0 %212, %v202
    %v214 = vpop.permute.xlu0 %213
    %v215 = vperm.slane %v174, 3
    %v216 = vlaneseq
    %v217 = vshrl.u32 %v216, 7
    %219 = vset.pattern.permute.xlu0 %v217
    %220 = vperm.xlu0 %219, %v215
    %v221 = vpop.permute.xlu0 %220
    %v222 = vlaneseq
    %v223 = vshrl.u32 %v222, 7
    %v224 = vadd.s32 %v223, 8
    %225 = vset.pattern.permute.xlu0 %v224
    %226 = vperm.xlu0 %225, %v215
    %v227 = vpop.permute.xlu0 %226
    %v228 = vperm.slane %v174, 4
    %v229 = vlaneseq
    %v230 = vshrl.u32 %v229, 7
    %232 = vset.pattern.permute.xlu0 %v230
    %233 = vperm.xlu0 %232, %v228
    %v234 = vpop.permute.xlu0 %233
    %v235 = vlaneseq
    %v236 = vshrl.u32 %v235, 7
    %v237 = vadd.s32 %v236, 8
    %238 = vset.pattern.permute.xlu0 %v237
    %239 = vperm.xlu0 %238, %v228
    %v240 = vpop.permute.xlu0 %239
    %v241 = vperm.slane %v174, 5
    %v242 = vlaneseq
    %v243 = vshrl.u32 %v242, 7
    %245 = vset.pattern.permute.xlu0 %v243
    %246 = vperm.xlu0 %245, %v241
    %v247 = vpop.permute.xlu0 %246
    %v248 = vlaneseq
    %v249 = vshrl.u32 %v248, 7
    %v250 = vadd.s32 %v249, 8
    %251 = vset.pattern.permute.xlu0 %v250
    %252 = vperm.xlu0 %251, %v241
    %v253 = vpop.permute.xlu0 %252
    %v254 = vperm.slane %v174, 6
    %v255 = vlaneseq
    %v256 = vshrl.u32 %v255, 7
    %258 = vset.pattern.permute.xlu0 %v256
    %259 = vperm.xlu0 %258, %v254
    %v260 = vpop.permute.xlu0 %259
    %v261 = vlaneseq
    %v262 = vshrl.u32 %v261, 7
    %v263 = vadd.s32 %v262, 8
    %264 = vset.pattern.permute.xlu0 %v263
    %265 = vperm.xlu0 %264, %v254
    %v266 = vpop.permute.xlu0 %265
    %v267 = vperm.slane %v174, 7
    %v268 = vlaneseq
    %v269 = vshrl.u32 %v268, 7
    %271 = vset.pattern.permute.xlu0 %v269
    %272 = vperm.xlu0 %271, %v267
    %v273 = vpop.permute.xlu0 %272
    %v274 = vlaneseq
    %v275 = vshrl.u32 %v274, 7
    %v276 = vadd.s32 %v275, 8
    %277 = vset.pattern.permute.xlu0 %v276
    %278 = vperm.xlu0 %277, %v267
    %v279 = vpop.permute.xlu0 %278
    %v280 = vperm.slane %v175, 0
    %v281 = vlaneseq
    %v282 = vshrl.u32 %v281, 7
    %284 = vset.pattern.permute.xlu0 %v282
    %285 = vperm.xlu0 %284, %v280
    %v286 = vpop.permute.xlu0 %285
    %v287 = vlaneseq
    %v288 = vshrl.u32 %v287, 7
    %v289 = vadd.s32 %v288, 8
    %290 = vset.pattern.permute.xlu0 %v289
    %291 = vperm.xlu0 %290, %v280
    %v292 = vpop.permute.xlu0 %291
    %v293 = vperm.slane %v175, 1
    %v294 = vlaneseq
    %v295 = vshrl.u32 %v294, 7
    %297 = vset.pattern.permute.xlu0 %v295
    %298 = vperm.xlu0 %297, %v293
    %v299 = vpop.permute.xlu0 %298
    %v300 = vlaneseq
    %v301 = vshrl.u32 %v300, 7
    %v302 = vadd.s32 %v301, 8
    %303 = vset.pattern.permute.xlu0 %v302
    %304 = vperm.xlu0 %303, %v293
    %v305 = vpop.permute.xlu0 %304
    %v306 = vperm.slane %v175, 2
    %v307 = vlaneseq
    %v308 = vshrl.u32 %v307, 7
    %310 = vset.pattern.permute.xlu0 %v308
    %311 = vperm.xlu0 %310, %v306
    %v312 = vpop.permute.xlu0 %311
    %v313 = vlaneseq
    %v314 = vshrl.u32 %v313, 7
    %v315 = vadd.s32 %v314, 8
    %316 = vset.pattern.permute.xlu0 %v315
    %317 = vperm.xlu0 %316, %v306
    %v318 = vpop.permute.xlu0 %317
    %v319 = vperm.slane %v175, 3
    %v320 = vlaneseq
    %v321 = vshrl.u32 %v320, 7
    %323 = vset.pattern.permute.xlu0 %v321
    %324 = vperm.xlu0 %323, %v319
    %v325 = vpop.permute.xlu0 %324
    %v326 = vlaneseq
    %v327 = vshrl.u32 %v326, 7
    %v328 = vadd.s32 %v327, 8
    %329 = vset.pattern.permute.xlu0 %v328
    %330 = vperm.xlu0 %329, %v319
    %v331 = vpop.permute.xlu0 %330
    %v332 = vperm.slane %v175, 4
    %v333 = vlaneseq
    %v334 = vshrl.u32 %v333, 7
    %336 = vset.pattern.permute.xlu0 %v334
    %337 = vperm.xlu0 %336, %v332
    %v338 = vpop.permute.xlu0 %337
    %v339 = vlaneseq
    %v340 = vshrl.u32 %v339, 7
    %v341 = vadd.s32 %v340, 8
    %342 = vset.pattern.permute.xlu0 %v341
    %343 = vperm.xlu0 %342, %v332
    %v344 = vpop.permute.xlu0 %343
    %v345 = vperm.slane %v175, 5
    %v346 = vlaneseq
    %v347 = vshrl.u32 %v346, 7
    %349 = vset.pattern.permute.xlu0 %v347
    %350 = vperm.xlu0 %349, %v345
    %v351 = vpop.permute.xlu0 %350
    %v352 = vlaneseq
    %v353 = vshrl.u32 %v352, 7
    %v354 = vadd.s32 %v353, 8
    %355 = vset.pattern.permute.xlu0 %v354
    %356 = vperm.xlu0 %355, %v345
    %v357 = vpop.permute.xlu0 %356
    %v358 = vperm.slane %v175, 6
    %v359 = vlaneseq
    %v360 = vshrl.u32 %v359, 7
    %362 = vset.pattern.permute.xlu0 %v360
    %363 = vperm.xlu0 %362, %v358
    %v364 = vpop.permute.xlu0 %363
    %v365 = vlaneseq
    %v366 = vshrl.u32 %v365, 7
    %v367 = vadd.s32 %v366, 8
    %368 = vset.pattern.permute.xlu0 %v367
    %369 = vperm.xlu0 %368, %v358
    %v370 = vpop.permute.xlu0 %369
    %v371 = vperm.slane %v175, 7
    %v372 = vlaneseq
    %v373 = vshrl.u32 %v372, 7
    %375 = vset.pattern.permute.xlu0 %v373
    %376 = vperm.xlu0 %375, %v371
    %v377 = vpop.permute.xlu0 %376
    %v378 = vlaneseq
    %v379 = vshrl.u32 %v378, 7
    %v380 = vadd.s32 %v379, 8
    %381 = vset.pattern.permute.xlu0 %v380
    %382 = vperm.xlu0 %381, %v371
    %v383 = vpop.permute.xlu0 %382
    %v384 = vmul.f32 %v142, %v182
    %v385 = vmul.f32 %v143, %v188
    %v386 = vmul.f32 %v144, %v195
    %v387 = vmul.f32 %v145, %v201
    %v388 = vmul.f32 %v146, %v208
    %v389 = vmul.f32 %v147, %v214
    %v390 = vmul.f32 %v148, %v221
    %v391 = vmul.f32 %v149, %v227
    %v392 = vmul.f32 %v150, %v234
    %v393 = vmul.f32 %v151, %v240
    %v394 = vmul.f32 %v152, %v247
    %v395 = vmul.f32 %v153, %v253
    %v396 = vmul.f32 %v154, %v260
    %v397 = vmul.f32 %v155, %v266
    %v398 = vmul.f32 %v156, %v273
    %v399 = vmul.f32 %v157, %v279
    %v400 = vmul.f32 %v158, %v286
    %v401 = vmul.f32 %v159, %v292
    %v402 = vmul.f32 %v160, %v299
    %v403 = vmul.f32 %v161, %v305
    %v404 = vmul.f32 %v162, %v312
    %v405 = vmul.f32 %v163, %v318
    %v406 = vmul.f32 %v164, %v325
    %v407 = vmul.f32 %v165, %v331
    %v408 = vmul.f32 %v166, %v338
    %v409 = vmul.f32 %v167, %v344
    %v410 = vmul.f32 %v168, %v351
    %v411 = vmul.f32 %v169, %v357
    %v412 = vmul.f32 %v170, %v364
    %v413 = vmul.f32 %v171, %v370
    %v414 = vmul.f32 %v172, %v377
    %v415 = vmul.f32 %v173, %v383
    %v416 = vadd.f32 %v384, %v385
    %v417 = vrot.slane %v416, 4
    %v418 = vadd.f32 %v416, %v417
    %v419 = vrot.slane %v418, 2
    %v420 = vadd.f32 %v418, %v419
    %v421 = vrot.slane %v420, 1
    %v422 = vadd.f32 %v420, %v421
    %v423 = vadd.f32 %v386, %v387
    %v424 = vrot.slane %v423, 4
    %v425 = vadd.f32 %v423, %v424
    %v426 = vrot.slane %v425, 2
    %v427 = vadd.f32 %v425, %v426
    %v428 = vrot.slane %v427, 1
    %v429 = vadd.f32 %v427, %v428
    %v430 = vadd.f32 %v388, %v389
    %v431 = vrot.slane %v430, 4
    %v432 = vadd.f32 %v430, %v431
    %v433 = vrot.slane %v432, 2
    %v434 = vadd.f32 %v432, %v433
    %v435 = vrot.slane %v434, 1
    %v436 = vadd.f32 %v434, %v435
    %v437 = vadd.f32 %v390, %v391
    %v438 = vrot.slane %v437, 4
    %v439 = vadd.f32 %v437, %v438
    %v440 = vrot.slane %v439, 2
    %v441 = vadd.f32 %v439, %v440
    %v442 = vrot.slane %v441, 1
    %v443 = vadd.f32 %v441, %v442
    %v444 = vadd.f32 %v392, %v393
    %v445 = vrot.slane %v444, 4
    %v446 = vadd.f32 %v444, %v445
    %v447 = vrot.slane %v446, 2
    %v448 = vadd.f32 %v446, %v447
    %v449 = vrot.slane %v448, 1
    %v450 = vadd.f32 %v448, %v449
    %v451 = vadd.f32 %v394, %v395
    %v452 = vrot.slane %v451, 4
    %v453 = vadd.f32 %v451, %v452
    %v454 = vrot.slane %v453, 2
    %v455 = vadd.f32 %v453, %v454
    %v456 = vrot.slane %v455, 1
    %v457 = vadd.f32 %v455, %v456
    %v458 = vadd.f32 %v396, %v397
    %v459 = vrot.slane %v458, 4
    %v460 = vadd.f32 %v458, %v459
    %v461 = vrot.slane %v460, 2
    %v462 = vadd.f32 %v460, %v461
    %v463 = vrot.slane %v462, 1
    %v464 = vadd.f32 %v462, %v463
    %v465 = vadd.f32 %v398, %v399
    %v466 = vrot.slane %v465, 4
    %v467 = vadd.f32 %v465, %v466
    %v468 = vrot.slane %v467, 2
    %v469 = vadd.f32 %v467, %v468
    %v470 = vrot.slane %v469, 1
    %v471 = vadd.f32 %v469, %v470
    %v472 = vadd.f32 %v400, %v401
    %v473 = vrot.slane %v472, 4
    %v474 = vadd.f32 %v472, %v473
    %v475 = vrot.slane %v474, 2
    %v476 = vadd.f32 %v474, %v475
    %v477 = vrot.slane %v476, 1
    %v478 = vadd.f32 %v476, %v477
    %v479 = vadd.f32 %v402, %v403
    %v480 = vrot.slane %v479, 4
    %v481 = vadd.f32 %v479, %v480
    %v482 = vrot.slane %v481, 2
    %v483 = vadd.f32 %v481, %v482
    %v484 = vrot.slane %v483, 1
    %v485 = vadd.f32 %v483, %v484
    %v486 = vadd.f32 %v404, %v405
    %v487 = vrot.slane %v486, 4
    %v488 = vadd.f32 %v486, %v487
    %v489 = vrot.slane %v488, 2
    %v490 = vadd.f32 %v488, %v489
    %v491 = vrot.slane %v490, 1
    %v492 = vadd.f32 %v490, %v491
    %v493 = vadd.f32 %v406, %v407
    %v494 = vrot.slane %v493, 4
    %v495 = vadd.f32 %v493, %v494
    %v496 = vrot.slane %v495, 2
    %v497 = vadd.f32 %v495, %v496
    %v498 = vrot.slane %v497, 1
    %v499 = vadd.f32 %v497, %v498
    %v500 = vadd.f32 %v408, %v409
    %v501 = vrot.slane %v500, 4
    %v502 = vadd.f32 %v500, %v501
    %v503 = vrot.slane %v502, 2
    %v504 = vadd.f32 %v502, %v503
    %v505 = vrot.slane %v504, 1
    %v506 = vadd.f32 %v504, %v505
    %v507 = vadd.f32 %v410, %v411
    %v508 = vrot.slane %v507, 4
    %v509 = vadd.f32 %v507, %v508
    %v510 = vrot.slane %v509, 2
    %v511 = vadd.f32 %v509, %v510
    %v512 = vrot.slane %v511, 1
    %v513 = vadd.f32 %v511, %v512
    %v514 = vadd.f32 %v412, %v413
    %v515 = vrot.slane %v514, 4
    %v516 = vadd.f32 %v514, %v515
    %v517 = vrot.slane %v516, 2
    %v518 = vadd.f32 %v516, %v517
    %v519 = vrot.slane %v518, 1
    %v520 = vadd.f32 %v518, %v519
    %v521 = vadd.f32 %v414, %v415
    %v522 = vrot.slane %v521, 4
    %v523 = vadd.f32 %v521, %v522
    %v524 = vrot.slane %v523, 2
    %v525 = vadd.f32 %v523, %v524
    %v526 = vrot.slane %v525, 1
    %v527 = vadd.f32 %v525, %v526
    %v528 = vpack.c.bf16 %v422, %v422
    %v529 = vpack.c.bf16 %v429, %v429
    %v530 = vpack.c.bf16 %v436, %v436
    %v531 = vpack.c.bf16 %v443, %v443
    %v532 = vpack.c.bf16 %v450, %v450
    %v533 = vpack.c.bf16 %v457, %v457
    %v534 = vpack.c.bf16 %v464, %v464
    %v535 = vpack.c.bf16 %v471, %v471
    %v536 = vpack.c.bf16 %v478, %v478
    %v537 = vpack.c.bf16 %v485, %v485
    %v538 = vpack.c.bf16 %v492, %v492
    %v539 = vpack.c.bf16 %v499, %v499
    %v540 = vpack.c.bf16 %v506, %v506
    %v541 = vpack.c.bf16 %v513, %v513
    %v542 = vpack.c.bf16 %v520, %v520
    %v543 = vpack.c.bf16 %v527, %v527
    %v544 = vld [vmem:[#allocation12] sm:$0xf]
    %v545 = vld [vmem:[#allocation12 + $0x4] sm:$0xf]
    %v546 = vld [vmem:[#allocation12 + $0x8] sm:$0xf]
    %v547 = vld [vmem:[#allocation12 + $0xc] sm:$0xf]
    %v548 = vld [vmem:[#allocation12 + $0x10] sm:$0xf]
    %v549 = vld [vmem:[#allocation12 + $0x14] sm:$0xf]
    %v550 = vld [vmem:[#allocation12 + $0x18] sm:$0xf]
    %v551 = vld [vmem:[#allocation12 + $0x1c] sm:$0xf]
    %v552 = vld [vmem:[#allocation12 + $0x20] sm:$0xf]
    %v553 = vld [vmem:[#allocation12 + $0x24] sm:$0xf]
    %v554 = vld [vmem:[#allocation12 + $0x28] sm:$0xf]
    %v555 = vld [vmem:[#allocation12 + $0x2c] sm:$0xf]
    %v556 = vld [vmem:[#allocation12 + $0x30] sm:$0xf]
    %v557 = vld [vmem:[#allocation12 + $0x34] sm:$0xf]
    %v558 = vld [vmem:[#allocation12 + $0x38] sm:$0xf]
    %v559 = vld [vmem:[#allocation12 + $0x3c] sm:$0xf]
    %v576 = vunpack.c.l.b16 %v528
    %v577 = vunpack.c.l.b16 %v529
    %v578 = vunpack.c.l.b16 %v530
    %v579 = vunpack.c.l.b16 %v531
    %v580 = vunpack.c.l.b16 %v532
    %v581 = vunpack.c.l.b16 %v533
    %v582 = vunpack.c.l.b16 %v534
    %v583 = vunpack.c.l.b16 %v535
    %v584 = vunpack.c.l.b16 %v536
    %v585 = vunpack.c.l.b16 %v537
    %v586 = vunpack.c.l.b16 %v538
    %v587 = vunpack.c.l.b16 %v539
    %v588 = vunpack.c.l.b16 %v540
    %v589 = vunpack.c.l.b16 %v541
    %v590 = vunpack.c.l.b16 %v542
    %v591 = vunpack.c.l.b16 %v543
    %vm592 = vcmask 1041409
    %v593 = vsel %vm592, %v577, %v576
    %vm594 = vcmask 1042434
    %v595 = vsel %vm594, %v578, %v593
    %vm596 = vcmask 1043459
    %v597 = vsel %vm596, %v579, %v595
    %vm598 = vcmask 1044484
    %v599 = vsel %vm598, %v580, %v597
    %vm600 = vcmask 1045509
    %v601 = vsel %vm600, %v581, %v599
    %vm602 = vcmask 1046534
    %v603 = vsel %vm602, %v582, %v601
    %vm604 = vcmask 1047559
    %v605 = vsel %vm604, %v583, %v603
    %v606 = vsel %vm592, %v585, %v584
    %v607 = vsel %vm594, %v586, %v606
    %v608 = vsel %vm596, %v587, %v607
    %v609 = vsel %vm598, %v588, %v608
    %v610 = vsel %vm600, %v589, %v609
    %v611 = vsel %vm602, %v590, %v610
    %v612 = vsel %vm604, %v591, %v611
    %v613 = vpack.c.b16 %v612, %v605
    %v631 = vunpack.c.l.b16 %v544
    %v632 = vunpack.c.l.b16 %v545
    %v633 = vunpack.c.l.b16 %v546
    %v634 = vunpack.c.l.b16 %v547
    %v635 = vunpack.c.l.b16 %v548
    %v636 = vunpack.c.l.b16 %v549
    %v637 = vunpack.c.l.b16 %v550
    %v638 = vunpack.c.l.b16 %v551
    %v639 = vunpack.c.l.b16 %v552
    %v640 = vunpack.c.l.b16 %v553
    %v641 = vunpack.c.l.b16 %v554
    %v642 = vunpack.c.l.b16 %v555
    %v643 = vunpack.c.l.b16 %v556
    %v644 = vunpack.c.l.b16 %v557
    %v645 = vunpack.c.l.b16 %v558
    %v646 = vunpack.c.l.b16 %v559
    %v647 = vpack.c.b16 %v632, %v631
    %v648 = vpack.c.b16 %v634, %v633
    %v649 = vpack.c.b16 %v636, %v635
    %v650 = vpack.c.b16 %v638, %v637
    %v651 = vpack.c.b16 %v640, %v639
    %v652 = vpack.c.b16 %v642, %v641
    %v653 = vpack.c.b16 %v644, %v643
    %v654 = vpack.c.b16 %v646, %v645
    %663 = vmatpush.bf16.msra.mxu0 %v654
    %664 = vmatpush.bf16.msra.mxu0 %v653
    %665 = vmatpush.bf16.msra.mxu0 %v652
    %666 = vmatpush.bf16.msra.mxu0 %v651
    %667 = vmatpush.bf16.msra.mxu0 %v650
    %668 = vmatpush.bf16.msra.mxu0 %v649
    %669 = vmatpush.bf16.msra.mxu0 %v648
    %670 = vmatpush.bf16.msra.mxu0 %v647
    %671 = vmatmul.bf16.gmra.mxu0 %v613
    %v672 = vpop.f32.mrf.mxu0
    %v673 = vadd.f32 0.0, %v672
    %v674 = vpop.f32.mrf.mxu0
    %v675 = vadd.f32 0.0, %v674
    %676 = vdwg.mxu0
    %v679 = vunpack.c.l.b16 %v115
    %v680 = vunpack.c.l.b16 %v116
    %v681 = vpack.c.b16 %v680, %v679
    %v699 = vunpack.c.l.b16 %v117
    %v700 = vunpack.c.l.b16 %v118
    %v701 = vunpack.c.l.b16 %v119
    %v702 = vunpack.c.l.b16 %v120
    %v703 = vunpack.c.l.b16 %v121
    %v704 = vunpack.c.l.b16 %v122
    %v705 = vunpack.c.l.b16 %v123
    %v706 = vunpack.c.l.b16 %v124
    %v707 = vunpack.c.l.b16 %v125
    %v708 = vunpack.c.l.b16 %v126
    %v709 = vunpack.c.l.b16 %v127
    %v710 = vunpack.c.l.b16 %v128
    %v711 = vunpack.c.l.b16 %v129
    %v712 = vunpack.c.l.b16 %v130
    %v713 = vunpack.c.l.b16 %v131
    %v714 = vunpack.c.l.b16 %v132
    %v715 = vpack.c.b16 %v700, %v699
    %v716 = vpack.c.b16 %v702, %v701
    %v717 = vpack.c.b16 %v704, %v703
    %v718 = vpack.c.b16 %v706, %v705
    %v719 = vpack.c.b16 %v708, %v707
    %v720 = vpack.c.b16 %v710, %v709
    %v721 = vpack.c.b16 %v712, %v711
    %v722 = vpack.c.b16 %v714, %v713
    %731 = vmatpush.bf16.msra.mxu0 %v722
    %732 = vmatpush.bf16.msra.mxu0 %v721
    %733 = vmatpush.bf16.msra.mxu0 %v720
    %734 = vmatpush.bf16.msra.mxu0 %v719
    %735 = vmatpush.bf16.msra.mxu0 %v718
    %736 = vmatpush.bf16.msra.mxu0 %v717
    %737 = vmatpush.bf16.msra.mxu0 %v716
    %738 = vmatpush.bf16.msra.mxu0 %v715
    %739 = vmatmul.bf16.gmra.mxu0 %v681
    %v740 = vpop.f32.mrf.mxu0
    %v741 = vadd.f32 %v673, %v740
    %v742 = vpop.f32.mrf.mxu0
    %v743 = vadd.f32 %v675, %v742
    %744 = vdwg.mxu0
    %v745 = vmax.f32 %v741, 0.0
    %v746 = vmax.f32 %v743, 0.0
    %747 = vst [vmem:[#allocation14] sm:$0xff] %v745
    %748 = vst [vmem:[#allocation14 + $0x8] sm:$0xff] %v746
    // Predicated region
    $region52: #{tpu_custom_call.1} parent=1 // pred_check
      _
    $region53: #{tpu_custom_call.1} parent=1 // pred_check_branch
      %750 = sbr.rel (0) target = $region55
    $region54: #{tpu_custom_call.1} parent=1 // pred_region
      %752 = vsyncadd [#allocation8], 0
      %s753 = sshll.u32 [#allocation14], 4
      %s754 = int_to_ptr.vmem [resolvable:$true] %s753
      %s755 = sshll.u32 %s6, 4
      %s756 = int_to_ptr.hbm [resolvable:$true] %s755
      %761 = dma.vmem_to_hbm [thread:$0]  %s754, 256, %s756, [#allocation8], 128, 128, 8
    $region55: #{tpu_custom_call.1} parent=1 // pred_fallthru
      _
    // Predicated region
    $region56: #{tpu_custom_call.1} parent=1 // pred_check
      _
    $region57: #{tpu_custom_call.1} parent=1 // pred_check_branch
      %763 = sbr.rel (0) target = $region59
    $region58: #{tpu_custom_call.1} parent=1 // pred_region
      %765 = dma.done [#allocation8], 256
    $region59: #{tpu_custom_call.1} parent=1 // pred_fallthru
      _
    %766 = vsyncpa [#allocation7], 1
    %767 = vsyncpa [#allocation10], 1
    %768 = vsyncpa [#allocation13], 1
    %769 = vsyncpa [#allocation8], 1
  %770 = vsyncmov [#allocation3]
  %s771 = vpop.sfrf %770
  %p772 = scmp.eq.s32.totalorder %s771, 0
  %p773 = pneg %p772
  %775 = shalt.err (%p773)

// kernel: tpu_custom_call.1
$region0: #{tpu_custom_call.1}
  #allocation0 [shape = 'u32[]', space=smem, size = 0x4, offset = 0x4, fixed_abs, tag = 'smem constant byte address 0x4 - core index']
  #allocation1 [shape = 'u32[72,128]{1,0:T(1,128)}', space=vmem, size = 0x9000, scoped, tag = 'internal scratch']
  #allocation2 [shape = 'f32[256,128]{1,0:T(8,128)}', space=vmem, size = 0x20000, scoped, tag = 'scratch operand']
  #allocation3 [shape = 's32[1]{0}', space=sflag, size = 0x4, scoped, tag = 'scratch operand']
  #allocation4 [shape = 's32[1]{0}', space=sflag, size = 0x4, scoped, tag = 'scoped memory for tpu_custom_call.1']
  #allocation5 [shape = 'u8[1024]{0}', space=smem, size = 0x400, scoped, tag = 'prefetched SMEM operand 0']
  #allocation15 [shape = 's32[]', space=sflag, size = 0x4, offset = 0, fixed_abs, tag = 'sflag constant byte address 0x0 - dummy sync flag']
  #allocation16 [shape = 's32[]', space=sflag, size = 0x4, offset = 0, fixed_abs, tag = 'sflag constant byte address 0x0 - dummy sync flag']
  #allocation17 [shape = 'u32[]', space=smem, size = 0x4, offset = 0x44, fixed_abs, tag = 'smem constant byte address 0x44 - assertion arg 0']
  #allocation18 [shape = 'u32[]', space=smem, size = 0x4, offset = 0x48, fixed_abs, tag = 'smem constant byte address 0x48 - assertion arg 1']
  %s0 = inlined_call_operand.hbm [shape: s32[256], index: 0, kind: input, shape index: {}]
  %s1 = inlined_call_operand.hbm [shape: f32[16,16], index: 1, kind: input, shape index: {}]
  %s2 = inlined_call_operand.hbm [shape: bf16[16,128], index: 2, kind: input, shape index: {}]
  %s3 = inlined_call_operand.hbm [shape: f32[64,128], index: 3, kind: input, shape index: {}]
  %s4 = inlined_call_operand.hbm [shape: bf16[128,128], index: 4, kind: input, shape index: {}]
  %s5 = inlined_call_operand.hbm [shape: bf16[128,128], index: 5, kind: input, shape index: {}]
  %s6 = inlined_call_operand.hbm [shape: f32[16,128], index: 6, kind: output, shape index: {}]
  %s7 = sld [smem:[#allocation0]]
  $region60: #{tpu_custom_call.1} parent=0
    _
  %s9 = ssub.s32 1, %s7
  %s10 = scalar_select 0, %s9, %s7
  %s12 = sshll.u32 %s0, 4
  %s13 = int_to_ptr.hbm [resolvable:$true] %s12
  %15 = dma.hbm_to_smem %s13, 32, [#allocation5], [#allocation4]
  %17 = dma.done [#allocation4], 32
  %18 = sfence
  $region1: #{tpu_custom_call.1} parent=0
    #allocation6 [shape = 'u8[8192]{0}', space=vmem, size = 0x2000, scoped, tag = 'input window, operand 1, single buffered']
    #allocation7 [shape = 's32[1]{0}', space=sflag, size = 0x4, scoped, tag = 'scoped memory for tpu_custom_call.1']
    #allocation8 [shape = 's32[1]{0}', space=sflag, size = 0x4, scoped, tag = 'scoped memory for tpu_custom_call.1']
    #allocation9 [shape = 'u8[4096]{0}', space=vmem, size = 0x1000, scoped, tag = 'input window, operand 2, single buffered']
    #allocation10 [shape = 's32[1]{0}', space=sflag, size = 0x4, scoped, tag = 'scoped memory for tpu_custom_call.1']
    #allocation11 [shape = 'u8[32768]{0}', space=vmem, size = 0x8000, scoped, tag = 'input window, operand 4, single buffered']
    #allocation12 [shape = 'u8[32768]{0}', space=vmem, size = 0x8000, scoped, tag = 'input window, operand 5, single buffered']
    #allocation13 [shape = 's32[1]{0}', space=sflag, size = 0x4, scoped, tag = 'scoped memory for tpu_custom_call.1']
    #allocation14 [shape = 'u8[8192]{0}', space=vmem, size = 0x2000, scoped, tag = 'output window, operand 0, single buffered']
    %19 = vsyncpa [#allocation7], 0
    %20 = vsyncpa [#allocation10], 0
    %21 = vsyncpa [#allocation13], 0
    %22 = vsyncpa [#allocation8], 0
    // Predicated region
    $region2: #{tpu_custom_call.1} parent=1 // pred_check
      _
    $region3: #{tpu_custom_call.1} parent=1 // pred_check_branch
      %24 = sbr.rel (0) target = $region5
    $region4: #{tpu_custom_call.1} parent=1 // pred_region
      %26 = vsyncadd [#allocation7], 0
      %s27 = sshll.u32 %s1, 4
      %s28 = int_to_ptr.hbm [resolvable:$true] %s27
      %s29 = sshll.u32 [#allocation6], 4
      %s30 = int_to_ptr.vmem [resolvable:$true] %s29
      %35 = dma.hbm_to_vmem [thread:$0]  %s28, 256, %s30, [#allocation7], 128, 128, 8
    $region5: #{tpu_custom_call.1} parent=1 // pred_fallthru
      _
    // Predicated region
    $region6: #{tpu_custom_call.1} parent=1 // pred_check
      _
    $region7: #{tpu_custom_call.1} parent=1 // pred_check_branch
      %37 = sbr.rel (0) target = $region9
    $region8: #{tpu_custom_call.1} parent=1 // pred_region
      %39 = vsyncadd [#allocation10], 0
      %s40 = sshll.u32 %s2, 4
      %s41 = int_to_ptr.hbm [resolvable:$true] %s40
      %s42 = sshll.u32 [#allocation9], 4
      %s43 = int_to_ptr.vmem [resolvable:$true] %s42
      %48 = dma.hbm_to_vmem [thread:$0]  %s41, 128, %s43, [#allocation10], 64, 64, 4
    $region9: #{tpu_custom_call.1} parent=1 // pred_fallthru
      _
    // Predicated region
    $region10: #{tpu_custom_call.1} parent=1 // pred_check
      _
    $region11: #{tpu_custom_call.1} parent=1 // pred_check_branch
      %50 = sbr.rel (0) target = $region13
    $region12: #{tpu_custom_call.1} parent=1 // pred_region
      %52 = vsyncadd [#allocation10], 0
      %s53 = sshll.u32 %s4, 4
      %s54 = int_to_ptr.hbm [resolvable:$true] %s53
      %s55 = sshll.u32 [#allocation11], 4
      %s56 = int_to_ptr.vmem [resolvable:$true] %s55
      %61 = dma.hbm_to_vmem [thread:$0]  %s54, 1024, %s56, [#allocation10], 64, 64, 4
    $region13: #{tpu_custom_call.1} parent=1 // pred_fallthru
      _
    // Predicated region
    $region14: #{tpu_custom_call.1} parent=1 // pred_check
      _
    $region15: #{tpu_custom_call.1} parent=1 // pred_check_branch
      %63 = sbr.rel (0) target = $region17
    $region16: #{tpu_custom_call.1} parent=1 // pred_region
      %65 = vsyncadd [#allocation13], 0
      %s66 = sshll.u32 %s5, 4
      %s67 = int_to_ptr.hbm [resolvable:$true] %s66
      %s68 = sshll.u32 [#allocation12], 4
      %s69 = int_to_ptr.vmem [resolvable:$true] %s68
      %74 = dma.hbm_to_vmem [thread:$0]  %s67, 1024, %s69, [#allocation13], 64, 64, 4
    $region17: #{tpu_custom_call.1} parent=1 // pred_fallthru
      _
    // Predicated region
    $region18: #{tpu_custom_call.1} parent=1 // pred_check
      _
    $region19: #{tpu_custom_call.1} parent=1 // pred_check_branch
      %76 = sbr.rel (0) target = $region21
    $region20: #{tpu_custom_call.1} parent=1 // pred_region
      %78 = dma.done [#allocation7], 256
    $region21: #{tpu_custom_call.1} parent=1 // pred_fallthru
      _
    // Predicated region
    $region22: #{tpu_custom_call.1} parent=1 // pred_check
      _
    $region23: #{tpu_custom_call.1} parent=1 // pred_check_branch
      %80 = sbr.rel (0) target = $region25
    $region24: #{tpu_custom_call.1} parent=1 // pred_region
      %82 = dma.done [#allocation10], 128
    $region25: #{tpu_custom_call.1} parent=1 // pred_fallthru
      _
    // Predicated region
    $region26: #{tpu_custom_call.1} parent=1 // pred_check
      _
    $region27: #{tpu_custom_call.1} parent=1 // pred_check_branch
      %84 = sbr.rel (0) target = $region29
    $region28: #{tpu_custom_call.1} parent=1 // pred_region
      %86 = dma.done [#allocation10], 1024
    $region29: #{tpu_custom_call.1} parent=1 // pred_fallthru
      _
    // Predicated region
    $region30: #{tpu_custom_call.1} parent=1 // pred_check
      _
    $region31: #{tpu_custom_call.1} parent=1 // pred_check_branch
      %88 = sbr.rel (0) target = $region33
    $region32: #{tpu_custom_call.1} parent=1 // pred_region
      %90 = dma.done [#allocation13], 1024
    $region33: #{tpu_custom_call.1} parent=1 // pred_fallthru
      _
    %s91 = smul.u32 0, 256
    loop: start=0, step=1, limit=256
    $region34: #{tpu_custom_call.1} parent=1 // loop_pre_header
      _
    $region35: #{tpu_custom_call.1} parent=1 // loop_header
      %s93 = sphi 0, %s97
      %p94 = scmp.ge.s32.totalorder %s93, 256
    $region36: #{tpu_custom_call.1} parent=1 // loop_header_branch
      %96 = sbr.rel (%p94) target = $region40
    $region37: #{tpu_custom_call.1} parent=1 // loop_body
      %s98 = sadd.s32 %s91, %s93
      %s99 = sld [smem:[#allocation5 + %s98]]
      %s100 = scalar_lea.hbm %s3, %s99
      %s101 = scalar_lea.vmem [#allocation2], %s93
      // Predicated region
      $region41: #{tpu_custom_call.1} parent=37 // pred_check
        _
      $region42: #{tpu_custom_call.1} parent=37 // pred_check_branch
        %103 = sbr.rel target = $region44
      $region43: #{tpu_custom_call.1} parent=37 // pred_region
        %104 = sst [smem:[#allocation17]] [#allocation16]
        %105 = sst [smem:[#allocation18]] [#allocation15]
      $region44: #{tpu_custom_call.1} parent=37 // pred_fallthru
        _
      %107 = shalt.err (0)
      %s109 = sshll.u32 %s100, 4
      %s110 = int_to_ptr.hbm [resolvable:$true] %s109
      %s111 = sshll.u32 %s101, 4
      %s112 = int_to_ptr.vmem [resolvable:$true] %s111
      %114 = dma.hbm_to_vmem [thread:$0]  %s110, 16, %s112, [#allocation3]
    $region38: #{tpu_custom_call.1} parent=1 // loop_footer
      %s97 = sadd.s32 1, %s93
    $region39: #{tpu_custom_call.1} parent=1 // loop_footer_branch
      %92 = sbr.rel target = $region35
    $region40: #{tpu_custom_call.1} parent=1 // loop_exit
      _
    %v115 = vld [vmem:[#allocation9] sm:$0xf]
    %v116 = vld [vmem:[#allocation9 + $0x4] sm:$0xf]
    %v117 = vld [vmem:[#allocation11] sm:$0xf]
    %v118 = vld [vmem:[#allocation11 + $0x4] sm:$0xf]
    %v119 = vld [vmem:[#allocation11 + $0x8] sm:$0xf]
    %v120 = vld [vmem:[#allocation11 + $0xc] sm:$0xf]
    %v121 = vld [vmem:[#allocation11 + $0x10] sm:$0xf]
    %v122 = vld [vmem:[#allocation11 + $0x14] sm:$0xf]
    %v123 = vld [vmem:[#allocation11 + $0x18] sm:$0xf]
    %v124 = vld [vmem:[#allocation11 + $0x1c] sm:$0xf]
    %v125 = vld [vmem:[#allocation11 + $0x20] sm:$0xf]
    %v126 = vld [vmem:[#allocation11 + $0x24] sm:$0xf]
    %v127 = vld [vmem:[#allocation11 + $0x28] sm:$0xf]
    %v128 = vld [vmem:[#allocation11 + $0x2c] sm:$0xf]
    %v129 = vld [vmem:[#allocation11 + $0x30] sm:$0xf]
    %v130 = vld [vmem:[#allocation11 + $0x34] sm:$0xf]
    %v131 = vld [vmem:[#allocation11 + $0x38] sm:$0xf]
    %v132 = vld [vmem:[#allocation11 + $0x3c] sm:$0xf]
    loop: start=0, step=1, limit=256
    $region45: #{tpu_custom_call.1} parent=1 // loop_pre_header
      _
    $region46: #{tpu_custom_call.1} parent=1 // loop_header
      %s134 = sphi 0, %s138
      %p135 = scmp.ge.s32.totalorder %s134, 256
    $region47: #{tpu_custom_call.1} parent=1 // loop_header_branch
      %137 = sbr.rel (%p135) target = $region51
    $region48: #{tpu_custom_call.1} parent=1 // loop_body
      %s139 = smul.u32 1, 1
      %s140 = sshll.u32 %s139, 4
      %141 = dma.done [#allocation3], %s140
    $region49: #{tpu_custom_call.1} parent=1 // loop_footer
      %s138 = sadd.s32 1, %s134
    $region50: #{tpu_custom_call.1} parent=1 // loop_footer_branch
      %133 = sbr.rel target = $region46
    $region51: #{tpu_custom_call.1} parent=1 // loop_exit
      _
    %v142 = vld [vmem:[#allocation2] sm:$0xff]
    %v143 = vld [vmem:[#allocation2 + $0x8] sm:$0xff]
    %v144 = vld [vmem:[#allocation2 + $0x10] sm:$0xff]
    %v145 = vld [vmem:[#allocation2 + $0x18] sm:$0xff]
    %v146 = vld [vmem:[#allocation2 + $0x20] sm:$0xff]
    %v147 = vld [vmem:[#allocation2 + $0x28] sm:$0xff]
    %v148 = vld [vmem:[#allocation2 + $0x30] sm:$0xff]
    %v149 = vld [vmem:[#allocation2 + $0x38] sm:$0xff]
    %v150 = vld [vmem:[#allocation2 + $0x40] sm:$0xff]
    %v151 = vld [vmem:[#allocation2 + $0x48] sm:$0xff]
    %v152 = vld [vmem:[#allocation2 + $0x50] sm:$0xff]
    %v153 = vld [vmem:[#allocation2 + $0x58] sm:$0xff]
    %v154 = vld [vmem:[#allocation2 + $0x60] sm:$0xff]
    %v155 = vld [vmem:[#allocation2 + $0x68] sm:$0xff]
    %v156 = vld [vmem:[#allocation2 + $0x70] sm:$0xff]
    %v157 = vld [vmem:[#allocation2 + $0x78] sm:$0xff]
    %v158 = vld [vmem:[#allocation2 + $0x80] sm:$0xff]
    %v159 = vld [vmem:[#allocation2 + $0x88] sm:$0xff]
    %v160 = vld [vmem:[#allocation2 + $0x90] sm:$0xff]
    %v161 = vld [vmem:[#allocation2 + $0x98] sm:$0xff]
    %v162 = vld [vmem:[#allocation2 + $0xa0] sm:$0xff]
    %v163 = vld [vmem:[#allocation2 + $0xa8] sm:$0xff]
    %v164 = vld [vmem:[#allocation2 + $0xb0] sm:$0xff]
    %v165 = vld [vmem:[#allocation2 + $0xb8] sm:$0xff]
    %v166 = vld [vmem:[#allocation2 + $0xc0] sm:$0xff]
    %v167 = vld [vmem:[#allocation2 + $0xc8] sm:$0xff]
    %v168 = vld [vmem:[#allocation2 + $0xd0] sm:$0xff]
    %v169 = vld [vmem:[#allocation2 + $0xd8] sm:$0xff]
    %v170 = vld [vmem:[#allocation2 + $0xe0] sm:$0xff]
    %v171 = vld [vmem:[#allocation2 + $0xe8] sm:$0xff]
    %v172 = vld [vmem:[#allocation2 + $0xf0] sm:$0xff]
    %v173 = vld [vmem:[#allocation2 + $0xf8] sm:$0xff]
    %v174 = vld [vmem:[#allocation6] sm:$0xff]
    %v175 = vld [vmem:[#allocation6 + $0x8] sm:$0xff]
    %v176 = vperm.slane %v174, 0
    %v177 = vlaneseq
    %v178 = vshrl.u32 %v177, 7
    %180 = vset.pattern.permute.xlu0 %v178
    %181 = vperm.xlu0 %180, %v176
    %v182 = vpop.permute.xlu0 %181
    %v183 = vlaneseq
    %v184 = vshrl.u32 %v183, 7
    %v185 = vadd.s32 %v184, 8
    %186 = vset.pattern.permute.xlu0 %v185
    %187 = vperm.xlu0 %186, %v176
    %v188 = vpop.permute.xlu0 %187
    %v189 = vperm.slane %v174, 1
    %v190 = vlaneseq
    %v191 = vshrl.u32 %v190, 7
    %193 = vset.pattern.permute.xlu0 %v191
    %194 = vperm.xlu0 %193, %v189
    %v195 = vpop.permute.xlu0 %194
    %v196 = vlaneseq
    %v197 = vshrl.u32 %v196, 7
    %v198 = vadd.s32 %v197, 8
    %199 = vset.pattern.permute.xlu0 %v198
    %200 = vperm.xlu0 %199, %v189
    %v201 = vpop.permute.xlu0 %200
    %v202 = vperm.slane %v174, 2
    %v203 = vlaneseq
    %v204 = vshrl.u32 %v203, 7
    %206 = vset.pattern.permute.xlu0 %v204
    %207 = vperm.xlu0 %206, %v202
    %v208 = vpop.permute.xlu0 %207
    %v209 = vlaneseq
    %v210 = vshrl.u32 %v209, 7
    %v211 = vadd.s32 %v210, 8
    %212 = vset.pattern.permute.xlu0 %v211
    %213 = vperm.xlu0 %212, %v202
    %v214 = vpop.permute.xlu0 %213
    %v215 = vperm.slane %v174, 3
    %v216 = vlaneseq
    %v217 = vshrl.u32 %v216, 7
    %219 = vset.pattern.permute.xlu0 %v217
    %220 = vperm.xlu0 %219, %v215
    %v221 = vpop.permute.xlu0 %220
    %v222 = vlaneseq
    %v223 = vshrl.u32 %v222, 7
    %v224 = vadd.s32 %v223, 8
    %225 = vset.pattern.permute.xlu0 %v224
    %226 = vperm.xlu0 %225, %v215
    %v227 = vpop.permute.xlu0 %226
    %v228 = vperm.slane %v174, 4
    %v229 = vlaneseq
    %v230 = vshrl.u32 %v229, 7
    %232 = vset.pattern.permute.xlu0 %v230
    %233 = vperm.xlu0 %232, %v228
    %v234 = vpop.permute.xlu0 %233
    %v235 = vlaneseq
    %v236 = vshrl.u32 %v235, 7
    %v237 = vadd.s32 %v236, 8
    %238 = vset.pattern.permute.xlu0 %v237
    %239 = vperm.xlu0 %238, %v228
    %v240 = vpop.permute.xlu0 %239
    %v241 = vperm.slane %v174, 5
    %v242 = vlaneseq
    %v243 = vshrl.u32 %v242, 7
    %245 = vset.pattern.permute.xlu0 %v243
    %246 = vperm.xlu0 %245, %v241
    %v247 = vpop.permute.xlu0 %246
    %v248 = vlaneseq
    %v249 = vshrl.u32 %v248, 7
    %v250 = vadd.s32 %v249, 8
    %251 = vset.pattern.permute.xlu0 %v250
    %252 = vperm.xlu0 %251, %v241
    %v253 = vpop.permute.xlu0 %252
    %v254 = vperm.slane %v174, 6
    %v255 = vlaneseq
    %v256 = vshrl.u32 %v255, 7
    %258 = vset.pattern.permute.xlu0 %v256
    %259 = vperm.xlu0 %258, %v254
    %v260 = vpop.permute.xlu0 %259
    %v261 = vlaneseq
    %v262 = vshrl.u32 %v261, 7
    %v263 = vadd.s32 %v262, 8
    %264 = vset.pattern.permute.xlu0 %v263
    %265 = vperm.xlu0 %264, %v254
    %v266 = vpop.permute.xlu0 %265
    %v267 = vperm.slane %v174, 7
    %v268 = vlaneseq
    %v269 = vshrl.u32 %v268, 7
    %271 = vset.pattern.permute.xlu0 %v269
    %272 = vperm.xlu0 %271, %v267
    %v273 = vpop.permute.xlu0 %272
    %v274 = vlaneseq
    %v275 = vshrl.u32 %v274, 7
    %v276 = vadd.s32 %v275, 8
    %277 = vset.pattern.permute.xlu0 %v276
    %278 = vperm.xlu0 %277, %v267
    %v279 = vpop.permute.xlu0 %278
    %v280 = vperm.slane %v175, 0
    %v281 = vlaneseq
    %v282 = vshrl.u32 %v281, 7
    %284 = vset.pattern.permute.xlu0 %v282
    %285 = vperm.xlu0 %284, %v280
    %v286 = vpop.permute.xlu0 %285
    %v287 = vlaneseq
    %v288 = vshrl.u32 %v287, 7
    %v289 = vadd.s32 %v288, 8
    %290 = vset.pattern.permute.xlu0 %v289
    %291 = vperm.xlu0 %290, %v280
    %v292 = vpop.permute.xlu0 %291
    %v293 = vperm.slane %v175, 1
    %v294 = vlaneseq
    %v295 = vshrl.u32 %v294, 7
    %297 = vset.pattern.permute.xlu0 %v295
    %298 = vperm.xlu0 %297, %v293
    %v299 = vpop.permute.xlu0 %298
    %v300 = vlaneseq
    %v301 = vshrl.u32 %v300, 7
    %v302 = vadd.s32 %v301, 8
    %303 = vset.pattern.permute.xlu0 %v302
    %304 = vperm.xlu0 %303, %v293
    %v305 = vpop.permute.xlu0 %304
    %v306 = vperm.slane %v175, 2
    %v307 = vlaneseq
    %v308 = vshrl.u32 %v307, 7
    %310 = vset.pattern.permute.xlu0 %v308
    %311 = vperm.xlu0 %310, %v306
    %v312 = vpop.permute.xlu0 %311
    %v313 = vlaneseq
    %v314 = vshrl.u32 %v313, 7
    %v315 = vadd.s32 %v314, 8
    %316 = vset.pattern.permute.xlu0 %v315
    %317 = vperm.xlu0 %316, %v306
    %v318 = vpop.permute.xlu0 %317
    %v319 = vperm.slane %v175, 3
    %v320 = vlaneseq
    %v321 = vshrl.u32 %v320, 7
    %323 = vset.pattern.permute.xlu0 %v321
    %324 = vperm.xlu0 %323, %v319
    %v325 = vpop.permute.xlu0 %324
    %v326 = vlaneseq
    %v327 = vshrl.u32 %v326, 7
    %v328 = vadd.s32 %v327, 8
    %329 = vset.pattern.permute.xlu0 %v328
    %330 = vperm.xlu0 %329, %v319
    %v331 = vpop.permute.xlu0 %330
    %v332 = vperm.slane %v175, 4
    %v333 = vlaneseq
    %v334 = vshrl.u32 %v333, 7
    %336 = vset.pattern.permute.xlu0 %v334
    %337 = vperm.xlu0 %336, %v332
    %v338 = vpop.permute.xlu0 %337
    %v339 = vlaneseq
    %v340 = vshrl.u32 %v339, 7
    %v341 = vadd.s32 %v340, 8
    %342 = vset.pattern.permute.xlu0 %v341
    %343 = vperm.xlu0 %342, %v332
    %v344 = vpop.permute.xlu0 %343
    %v345 = vperm.slane %v175, 5
    %v346 = vlaneseq
    %v347 = vshrl.u32 %v346, 7
    %349 = vset.pattern.permute.xlu0 %v347
    %350 = vperm.xlu0 %349, %v345
    %v351 = vpop.permute.xlu0 %350
    %v352 = vlaneseq
    %v353 = vshrl.u32 %v352, 7
    %v354 = vadd.s32 %v353, 8
    %355 = vset.pattern.permute.xlu0 %v354
    %356 = vperm.xlu0 %355, %v345
    %v357 = vpop.permute.xlu0 %356
    %v358 = vperm.slane %v175, 6
    %v359 = vlaneseq
    %v360 = vshrl.u32 %v359, 7
    %362 = vset.pattern.permute.xlu0 %v360
    %363 = vperm.xlu0 %362, %v358
    %v364 = vpop.permute.xlu0 %363
    %v365 = vlaneseq
    %v366 = vshrl.u32 %v365, 7
    %v367 = vadd.s32 %v366, 8
    %368 = vset.pattern.permute.xlu0 %v367
    %369 = vperm.xlu0 %368, %v358
    %v370 = vpop.permute.xlu0 %369
    %v371 = vperm.slane %v175, 7
    %v372 = vlaneseq
    %v373 = vshrl.u32 %v372, 7
    %375 = vset.pattern.permute.xlu0 %v373
    %376 = vperm.xlu0 %375, %v371
    %v377 = vpop.permute.xlu0 %376
    %v378 = vlaneseq
    %v379 = vshrl.u32 %v378, 7
    %v380 = vadd.s32 %v379, 8
    %381 = vset.pattern.permute.xlu0 %v380
    %382 = vperm.xlu0 %381, %v371
    %v383 = vpop.permute.xlu0 %382
    %v384 = vmul.f32 %v142, %v182
    %v385 = vmul.f32 %v143, %v188
    %v386 = vmul.f32 %v144, %v195
    %v387 = vmul.f32 %v145, %v201
    %v388 = vmul.f32 %v146, %v208
    %v389 = vmul.f32 %v147, %v214
    %v390 = vmul.f32 %v148, %v221
    %v391 = vmul.f32 %v149, %v227
    %v392 = vmul.f32 %v150, %v234
    %v393 = vmul.f32 %v151, %v240
    %v394 = vmul.f32 %v152, %v247
    %v395 = vmul.f32 %v153, %v253
    %v396 = vmul.f32 %v154, %v260
    %v397 = vmul.f32 %v155, %v266
    %v398 = vmul.f32 %v156, %v273
    %v399 = vmul.f32 %v157, %v279
    %v400 = vmul.f32 %v158, %v286
    %v401 = vmul.f32 %v159, %v292
    %v402 = vmul.f32 %v160, %v299
    %v403 = vmul.f32 %v161, %v305
    %v404 = vmul.f32 %v162, %v312
    %v405 = vmul.f32 %v163, %v318
    %v406 = vmul.f32 %v164, %v325
    %v407 = vmul.f32 %v165, %v331
    %v408 = vmul.f32 %v166, %v338
    %v409 = vmul.f32 %v167, %v344
    %v410 = vmul.f32 %v168, %v351
    %v411 = vmul.f32 %v169, %v357
    %v412 = vmul.f32 %v170, %v364
    %v413 = vmul.f32 %v171, %v370
    %v414 = vmul.f32 %v172, %v377
    %v415 = vmul.f32 %v173, %v383
    %v416 = vadd.f32 %v384, %v385
    %v417 = vrot.slane %v416, 4
    %v418 = vadd.f32 %v416, %v417
    %v419 = vrot.slane %v418, 2
    %v420 = vadd.f32 %v418, %v419
    %v421 = vrot.slane %v420, 1
    %v422 = vadd.f32 %v420, %v421
    %v423 = vadd.f32 %v386, %v387
    %v424 = vrot.slane %v423, 4
    %v425 = vadd.f32 %v423, %v424
    %v426 = vrot.slane %v425, 2
    %v427 = vadd.f32 %v425, %v426
    %v428 = vrot.slane %v427, 1
    %v429 = vadd.f32 %v427, %v428
    %v430 = vadd.f32 %v388, %v389
    %v431 = vrot.slane %v430, 4
    %v432 = vadd.f32 %v430, %v431
    %v433 = vrot.slane %v432, 2
    %v434 = vadd.f32 %v432, %v433
    %v435 = vrot.slane %v434, 1
    %v436 = vadd.f32 %v434, %v435
    %v437 = vadd.f32 %v390, %v391
    %v438 = vrot.slane %v437, 4
    %v439 = vadd.f32 %v437, %v438
    %v440 = vrot.slane %v439, 2
    %v441 = vadd.f32 %v439, %v440
    %v442 = vrot.slane %v441, 1
    %v443 = vadd.f32 %v441, %v442
    %v444 = vadd.f32 %v392, %v393
    %v445 = vrot.slane %v444, 4
    %v446 = vadd.f32 %v444, %v445
    %v447 = vrot.slane %v446, 2
    %v448 = vadd.f32 %v446, %v447
    %v449 = vrot.slane %v448, 1
    %v450 = vadd.f32 %v448, %v449
    %v451 = vadd.f32 %v394, %v395
    %v452 = vrot.slane %v451, 4
    %v453 = vadd.f32 %v451, %v452
    %v454 = vrot.slane %v453, 2
    %v455 = vadd.f32 %v453, %v454
    %v456 = vrot.slane %v455, 1
    %v457 = vadd.f32 %v455, %v456
    %v458 = vadd.f32 %v396, %v397
    %v459 = vrot.slane %v458, 4
    %v460 = vadd.f32 %v458, %v459
    %v461 = vrot.slane %v460, 2
    %v462 = vadd.f32 %v460, %v461
    %v463 = vrot.slane %v462, 1
    %v464 = vadd.f32 %v462, %v463
    %v465 = vadd.f32 %v398, %v399
    %v466 = vrot.slane %v465, 4
    %v467 = vadd.f32 %v465, %v466
    %v468 = vrot.slane %v467, 2
    %v469 = vadd.f32 %v467, %v468
    %v470 = vrot.slane %v469, 1
    %v471 = vadd.f32 %v469, %v470
    %v472 = vadd.f32 %v400, %v401
    %v473 = vrot.slane %v472, 4
    %v474 = vadd.f32 %v472, %v473
    %v475 = vrot.slane %v474, 2
    %v476 = vadd.f32 %v474, %v475
    %v477 = vrot.slane %v476, 1
    %v478 = vadd.f32 %v476, %v477
    %v479 = vadd.f32 %v402, %v403
    %v480 = vrot.slane %v479, 4
    %v481 = vadd.f32 %v479, %v480
    %v482 = vrot.slane %v481, 2
    %v483 = vadd.f32 %v481, %v482
    %v484 = vrot.slane %v483, 1
    %v485 = vadd.f32 %v483, %v484
    %v486 = vadd.f32 %v404, %v405
    %v487 = vrot.slane %v486, 4
    %v488 = vadd.f32 %v486, %v487
    %v489 = vrot.slane %v488, 2
    %v490 = vadd.f32 %v488, %v489
    %v491 = vrot.slane %v490, 1
    %v492 = vadd.f32 %v490, %v491
    %v493 = vadd.f32 %v406, %v407
    %v494 = vrot.slane %v493, 4
    %v495 = vadd.f32 %v493, %v494
    %v496 = vrot.slane %v495, 2
    %v497 = vadd.f32 %v495, %v496
    %v498 = vrot.slane %v497, 1
    %v499 = vadd.f32 %v497, %v498
    %v500 = vadd.f32 %v408, %v409
    %v501 = vrot.slane %v500, 4
    %v502 = vadd.f32 %v500, %v501
    %v503 = vrot.slane %v502, 2
    %v504 = vadd.f32 %v502, %v503
    %v505 = vrot.slane %v504, 1
    %v506 = vadd.f32 %v504, %v505
    %v507 = vadd.f32 %v410, %v411
    %v508 = vrot.slane %v507, 4
    %v509 = vadd.f32 %v507, %v508
    %v510 = vrot.slane %v509, 2
    %v511 = vadd.f32 %v509, %v510
    %v512 = vrot.slane %v511, 1
    %v513 = vadd.f32 %v511, %v512
    %v514 = vadd.f32 %v412, %v413
    %v515 = vrot.slane %v514, 4
    %v516 = vadd.f32 %v514, %v515
    %v517 = vrot.slane %v516, 2
    %v518 = vadd.f32 %v516, %v517
    %v519 = vrot.slane %v518, 1
    %v520 = vadd.f32 %v518, %v519
    %v521 = vadd.f32 %v414, %v415
    %v522 = vrot.slane %v521, 4
    %v523 = vadd.f32 %v521, %v522
    %v524 = vrot.slane %v523, 2
    %v525 = vadd.f32 %v523, %v524
    %v526 = vrot.slane %v525, 1
    %v527 = vadd.f32 %v525, %v526
    %v528 = vpack.c.bf16 %v422, %v422
    %v529 = vpack.c.bf16 %v429, %v429
    %v530 = vpack.c.bf16 %v436, %v436
    %v531 = vpack.c.bf16 %v443, %v443
    %v532 = vpack.c.bf16 %v450, %v450
    %v533 = vpack.c.bf16 %v457, %v457
    %v534 = vpack.c.bf16 %v464, %v464
    %v535 = vpack.c.bf16 %v471, %v471
    %v536 = vpack.c.bf16 %v478, %v478
    %v537 = vpack.c.bf16 %v485, %v485
    %v538 = vpack.c.bf16 %v492, %v492
    %v539 = vpack.c.bf16 %v499, %v499
    %v540 = vpack.c.bf16 %v506, %v506
    %v541 = vpack.c.bf16 %v513, %v513
    %v542 = vpack.c.bf16 %v520, %v520
    %v543 = vpack.c.bf16 %v527, %v527
    %v544 = vld [vmem:[#allocation12] sm:$0xf]
    %v545 = vld [vmem:[#allocation12 + $0x4] sm:$0xf]
    %v546 = vld [vmem:[#allocation12 + $0x8] sm:$0xf]
    %v547 = vld [vmem:[#allocation12 + $0xc] sm:$0xf]
    %v548 = vld [vmem:[#allocation12 + $0x10] sm:$0xf]
    %v549 = vld [vmem:[#allocation12 + $0x14] sm:$0xf]
    %v550 = vld [vmem:[#allocation12 + $0x18] sm:$0xf]
    %v551 = vld [vmem:[#allocation12 + $0x1c] sm:$0xf]
    %v552 = vld [vmem:[#allocation12 + $0x20] sm:$0xf]
    %v553 = vld [vmem:[#allocation12 + $0x24] sm:$0xf]
    %v554 = vld [vmem:[#allocation12 + $0x28] sm:$0xf]
    %v555 = vld [vmem:[#allocation12 + $0x2c] sm:$0xf]
    %v556 = vld [vmem:[#allocation12 + $0x30] sm:$0xf]
    %v557 = vld [vmem:[#allocation12 + $0x34] sm:$0xf]
    %v558 = vld [vmem:[#allocation12 + $0x38] sm:$0xf]
    %v559 = vld [vmem:[#allocation12 + $0x3c] sm:$0xf]
    %v576 = vunpack.c.l.b16 %v528
    %v577 = vunpack.c.l.b16 %v529
    %v578 = vunpack.c.l.b16 %v530
    %v579 = vunpack.c.l.b16 %v531
    %v580 = vunpack.c.l.b16 %v532
    %v581 = vunpack.c.l.b16 %v533
    %v582 = vunpack.c.l.b16 %v534
    %v583 = vunpack.c.l.b16 %v535
    %v584 = vunpack.c.l.b16 %v536
    %v585 = vunpack.c.l.b16 %v537
    %v586 = vunpack.c.l.b16 %v538
    %v587 = vunpack.c.l.b16 %v539
    %v588 = vunpack.c.l.b16 %v540
    %v589 = vunpack.c.l.b16 %v541
    %v590 = vunpack.c.l.b16 %v542
    %v591 = vunpack.c.l.b16 %v543
    %vm592 = vcmask 1041409
    %v593 = vsel %vm592, %v577, %v576
    %vm594 = vcmask 1042434
    %v595 = vsel %vm594, %v578, %v593
    %vm596 = vcmask 1043459
    %v597 = vsel %vm596, %v579, %v595
    %vm598 = vcmask 1044484
    %v599 = vsel %vm598, %v580, %v597
    %vm600 = vcmask 1045509
    %v601 = vsel %vm600, %v581, %v599
    %vm602 = vcmask 1046534
    %v603 = vsel %vm602, %v582, %v601
    %vm604 = vcmask 1047559
    %v605 = vsel %vm604, %v583, %v603
    %v606 = vsel %vm592, %v585, %v584
    %v607 = vsel %vm594, %v586, %v606
    %v608 = vsel %vm596, %v587, %v607
    %v609 = vsel %vm598, %v588, %v608
    %v610 = vsel %vm600, %v589, %v609
    %v611 = vsel %vm602, %v590, %v610
    %v612 = vsel %vm604, %v591, %v611
    %v613 = vpack.c.b16 %v612, %v605
    %v631 = vunpack.c.l.b16 %v544
    %v632 = vunpack.c.l.b16 %v545
    %v633 = vunpack.c.l.b16 %v546
    %v634 = vunpack.c.l.b16 %v547
    %v635 = vunpack.c.l.b16 %v548
    %v636 = vunpack.c.l.b16 %v549
    %v637 = vunpack.c.l.b16 %v550
    %v638 = vunpack.c.l.b16 %v551
    %v639 = vunpack.c.l.b16 %v552
    %v640 = vunpack.c.l.b16 %v553
    %v641 = vunpack.c.l.b16 %v554
    %v642 = vunpack.c.l.b16 %v555
    %v643 = vunpack.c.l.b16 %v556
    %v644 = vunpack.c.l.b16 %v557
    %v645 = vunpack.c.l.b16 %v558
    %v646 = vunpack.c.l.b16 %v559
    %v647 = vpack.c.b16 %v632, %v631
    %v648 = vpack.c.b16 %v634, %v633
    %v649 = vpack.c.b16 %v636, %v635
    %v650 = vpack.c.b16 %v638, %v637
    %v651 = vpack.c.b16 %v640, %v639
    %v652 = vpack.c.b16 %v642, %v641
    %v653 = vpack.c.b16 %v644, %v643
    %v654 = vpack.c.b16 %v646, %v645
    %663 = vmatpush.bf16.msra.mxu0 %v654
    %664 = vmatpush.bf16.msra.mxu0 %v653
    %665 = vmatpush.bf16.msra.mxu0 %v652
    %666 = vmatpush.bf16.msra.mxu0 %v651
    %667 = vmatpush.bf16.msra.mxu0 %v650
    %668 = vmatpush.bf16.msra.mxu0 %v649
    %669 = vmatpush.bf16.msra.mxu0 %v648
    %670 = vmatpush.bf16.msra.mxu0 %v647
    %671 = vmatmul.bf16.gmra.mxu0 %v613
    %v672 = vpop.f32.mrf.mxu0
    %v673 = vadd.f32 0.0, %v672
    %v674 = vpop.f32.mrf.mxu0
    %v675 = vadd.f32 0.0, %v674
    %676 = vdwg.mxu0
    %v679 = vunpack.c.l.b16 %v115
    %v680 = vunpack.c.l.b16 %v116
    %v681 = vpack.c.b16 %v680, %v679
    %v699 = vunpack.c.l.b16 %v117
    %v700 = vunpack.c.l.b16 %v118
    %v701 = vunpack.c.l.b16 %v119
    %v702 = vunpack.c.l.b16 %v120
    %v703 = vunpack.c.l.b16 %v121
    %v704 = vunpack.c.l.b16 %v122
    %v705 = vunpack.c.l.b16 %v123
    %v706 = vunpack.c.l.b16 %v124
    %v707 = vunpack.c.l.b16 %v125
    %v708 = vunpack.c.l.b16 %v126
    %v709 = vunpack.c.l.b16 %v127
    %v710 = vunpack.c.l.b16 %v128
    %v711 = vunpack.c.l.b16 %v129
    %v712 = vunpack.c.l.b16 %v130
    %v713 = vunpack.c.l.b16 %v131
    %v714 = vunpack.c.l.b16 %v132
    %v715 = vpack.c.b16 %v700, %v699
    %v716 = vpack.c.b16 %v702, %v701
    %v717 = vpack.c.b16 %v704, %v703
    %v718 = vpack.c.b16 %v706, %v705
    %v719 = vpack.c.b16 %v708, %v707
    %v720 = vpack.c.b16 %v710, %v709
    %v721 = vpack.c.b16 %v712, %v711
    %v722 = vpack.c.b16 %v714, %v713
    %731 = vmatpush.bf16.msra.mxu0 %v722
    %732 = vmatpush.bf16.msra.mxu0 %v721
    %733 = vmatpush.bf16.msra.mxu0 %v720
    %734 = vmatpush.bf16.msra.mxu0 %v719
    %735 = vmatpush.bf16.msra.mxu0 %v718
    %736 = vmatpush.bf16.msra.mxu0 %v717
    %737 = vmatpush.bf16.msra.mxu0 %v716
    %738 = vmatpush.bf16.msra.mxu0 %v715
    %739 = vmatmul.bf16.gmra.mxu0 %v681
    %v740 = vpop.f32.mrf.mxu0
    %v741 = vadd.f32 %v673, %v740
    %v742 = vpop.f32.mrf.mxu0
    %v743 = vadd.f32 %v675, %v742
    %744 = vdwg.mxu0
    %v745 = vmax.f32 %v741, 0.0
    %v746 = vmax.f32 %v743, 0.0
    %747 = vst [vmem:[#allocation14] sm:$0xff] %v745
    %748 = vst [vmem:[#allocation14 + $0x8] sm:$0xff] %v746
    // Predicated region
    $region52: #{tpu_custom_call.1} parent=1 // pred_check
      _
    $region53: #{tpu_custom_call.1} parent=1 // pred_check_branch
      %750 = sbr.rel (0) target = $region55
    $region54: #{tpu_custom_call.1} parent=1 // pred_region
      %752 = vsyncadd [#allocation8], 0
      %s753 = sshll.u32 [#allocation14], 4
      %s754 = int_to_ptr.vmem [resolvable:$true] %s753
      %s755 = sshll.u32 %s6, 4
      %s756 = int_to_ptr.hbm [resolvable:$true] %s755
      %761 = dma.vmem_to_hbm [thread:$0]  %s754, 256, %s756, [#allocation8], 128, 128, 8
    $region55: #{tpu_custom_call.1} parent=1 // pred_fallthru
      _
    // Predicated region
    $region56: #{tpu_custom_call.1} parent=1 // pred_check
      _
    $region57: #{tpu_custom_call.1} parent=1 // pred_check_branch
      %763 = sbr.rel (0) target = $region59
    $region58: #{tpu_custom_call.1} parent=1 // pred_region
      %765 = dma.done [#allocation8], 256
    $region59: #{tpu_custom_call.1} parent=1 // pred_fallthru
      _
    %766 = vsyncpa [#allocation7], 1
    %767 = vsyncpa [#allocation10], 1
    %768 = vsyncpa [#allocation13], 1
    %769 = vsyncpa [#allocation8], 1
  %770 = vsyncmov [#allocation3]
  %s771 = vpop.sfrf %770
  %p772 = scmp.eq.s32.totalorder %s771, 0
  %p773 = pneg %p772
  %775 = shalt.err (%p773)

</llo_original>
